<compile_context>
chip_gen: v7x
topology: tpu7x:2x2x1
jax: 0.10.0
libtpu: 0.0.40
codegen_flags: <defaults>
</compile_context>

<pallas_src>
import jax
import jax.numpy as jnp
from jax.experimental import pallas as pl
from jax.experimental.pallas import tpu as pltpu


# ---------------------------------------------------------------------------
# Fused Conv3d(3x3x3, pad=1, no bias) + ReLU + GroupNorm kernel
# ---------------------------------------------------------------------------
def make_conv_relu_gn_kernel(dhw, cout, cg, eps):
    inv_cnt = 1.0 / float(dhw * cg)   # GroupNorm count: spatial * channels-per-group

    def kernel(p_ref, w_ref, g_ref, b_ref, m_ref, o_ref):
        # p_ref: (1, 27*cin, DHW) bf16   im2col patches for one batch element
        # w_ref: (cout, 27*cin)   bf16   conv weights
        # g_ref, b_ref: (cout, 1) f32    GroupNorm affine params
        # m_ref: (cout, cout)     f32    group-membership mask
        # o_ref: (1, cout, DHW)   f32    lane-dense output block

        # ---- Conv3d: one fat-K MXU matmul (bf16 in, f32 accumulate) ----
        y = jnp.dot(w_ref[...], p_ref[0],
                    preferred_element_type=jnp.float32)            # (cout, DHW)

        # ---- ReLU ----
        y = jnp.maximum(y, 0.0)

        # ---- GroupNorm ----
        # Sum channels within each group (channels are on sublanes) via the
        # membership-mask matmul, then reduce the lane (spatial) axis.
        yg = jnp.dot(m_ref[...], y, preferred_element_type=jnp.float32)
        yg2 = jnp.dot(m_ref[...], y * y, preferred_element_type=jnp.float32)
        mean = jnp.sum(yg, axis=1, keepdims=True) * inv_cnt        # (cout, 1)
        ex2 = jnp.sum(yg2, axis=1, keepdims=True) * inv_cnt        # (cout, 1)
        var = jnp.maximum(ex2 - mean * mean, 0.0)                  # clamp >= 0
        inv = jax.lax.rsqrt(var + eps)

        o_ref[0] = (y - mean) * inv * g_ref[...] + b_ref[...]      # (cout, DHW)

    return kernel


def _im2col_3x3x3(x):
    """x: (N, C, D, H, W) -> (N, 27*C, D*H*W); tap order (kd, kh, kw, c)."""
    N, C, D, H, W = x.shape
    xp = jnp.pad(x, ((0, 0), (0, 0), (1, 1), (1, 1), (1, 1)))
    cols = []
    for kd in range(3):
        for kh in range(3):
            for kw in range(3):
                cols.append(
                    xp[:, :, kd:kd + D, kh:kh + H, kw:kw + W].reshape(N, C, D * H * W))
    return jnp.concatenate(cols, axis=1)


def single_conv_relu_gn(x_ncdhw, w, gamma, beta, num_groups, eps=1e-5):
    """SingleConv(order='crg') on NCDHW input.

    x_ncdhw: (N, cin, D, H, W)
    w:       (cout, cin, 3, 3, 3)   (PyTorch Conv3d layout, no bias)
    gamma, beta: (cout,)            (GroupNorm affine)
    """
    N, cin, D, H, W = x_ncdhw.shape
    cout = w.shape[0]
    groups = num_groups if cout >= num_groups else 1
    cg = cout // groups
    dhw = D * H * W
    k27 = 27 * cin

    # im2col patches (XLA glue). bf16 feeds the MXU; accumulation is f32.
    # TODO(synk): for production-size volumes, replace the 27x im2col HBM
    # expansion with in-kernel halo handling on a depth-tiled grid (manual DMA
    # + vmem_limit_bytes sized to the v7x 64 MiB budget).
    patches = _im2col_3x3x3(x_ncdhw).astype(jnp.bfloat16)          # (N, 27*cin, DHW)

    # weights (cout, cin, kd, kh, kw) -> (cout, (kd,kh,kw,cin)) to match im2col order
    w_mat = jnp.transpose(w, (0, 2, 3, 4, 1)).reshape(cout, k27).astype(jnp.bfloat16)

    # group-membership mask: m[i, j] = 1 if channel j is in channel i's group
    gidx = jnp.arange(cout) // cg
    m = (gidx[:, None] == gidx[None, :]).astype(jnp.float32)

    g2 = gamma.reshape(cout, 1).astype(jnp.float32)
    b2 = beta.reshape(cout, 1).astype(jnp.float32)

    kernel = make_conv_relu_gn_kernel(dhw, cout, cg, eps)

    out = pl.pallas_call(
        kernel,
        out_shape=jax.ShapeDtypeStruct((N, cout, dhw), jnp.float32),
        grid=(N,),
        in_specs=[
            pl.BlockSpec((1, k27, dhw), lambda n: (n, 0, 0)),
            pl.BlockSpec((cout, k27), lambda n: (0, 0)),
            pl.BlockSpec((cout, 1), lambda n: (0, 0)),
            pl.BlockSpec((cout, 1), lambda n: (0, 0)),
            pl.BlockSpec((cout, cout), lambda n: (0, 0)),
        ],
        out_specs=pl.BlockSpec((1, cout, dhw), lambda n: (n, 0, 0)),
        compiler_params=pltpu.CompilerParams(
            dimension_semantics=("parallel",)),
    )(patches, w_mat, g2, b2, m)

    return out.reshape(N, cout, D, H, W)


# ---------------------------------------------------------------------------
# Decoder glue (nearest upsample + concat) and forward
# ---------------------------------------------------------------------------
def nearest_resize_ncdhw(x, size):
    """F.interpolate(mode='nearest', size=size): in_idx = floor(out_idx*in/out)."""
    N, C, D, H, W = x.shape
    Do, Ho, Wo = size
    di = (jnp.arange(Do) * D) // Do
    hi = (jnp.arange(Ho) * H) // Ho
    wi = (jnp.arange(Wo) * W) // Wo
    return x[:, :, di][:, :, :, hi][:, :, :, :, wi]


def decoder_forward(encoder_features, x, params, num_groups=8):
    """Decoder.forward (DoubleConv / concat branch). Inputs/outputs are NCDHW."""
    up = nearest_resize_ncdhw(x, encoder_features.shape[2:])
    joined = jnp.concatenate([encoder_features, up], axis=1)       # NCDHW
    # TODO(synk): fuse concat/pad and both SingleConvs into one pallas_call
    # (per-tile intermediate kept in VMEM) once depth-tiled halo handling exists.
    h = single_conv_relu_gn(joined, params["w1"], params["g1"], params["b1"], num_groups)
    h = single_conv_relu_gn(h, params["w2"], params["g2"], params["b2"], num_groups)
    return h


# ---------------------------------------------------------------------------
# Pure-JAX reference (for correctness check)
# ---------------------------------------------------------------------------
def _ref_single_conv(x, w, gamma, beta, num_groups, eps=1e-5):
    y = jax.lax.conv_general_dilated(
        x, w, window_strides=(1, 1, 1),
        padding=((1, 1), (1, 1), (1, 1)),
        dimension_numbers=("NCDHW", "OIDHW", "NCDHW"))
    y = jnp.maximum(y, 0.0)
    N, C, D, H, W = y.shape
    groups = num_groups if C >= num_groups else 1
    yg = y.reshape(N, groups, C // groups, D, H, W)
    mean = yg.mean(axis=(2, 3, 4, 5), keepdims=True)
    var = yg.var(axis=(2, 3, 4, 5), keepdims=True)
    yn = ((yg - mean) * jax.lax.rsqrt(var + eps)).reshape(N, C, D, H, W)
    return yn * gamma[None, :, None, None, None] + beta[None, :, None, None, None]


def _ref_decoder(encoder_features, x, params, num_groups=8):
    up = nearest_resize_ncdhw(x, encoder_features.shape[2:])
    joined = jnp.concatenate([encoder_features, up], axis=1)
    h = _ref_single_conv(joined, params["w1"], params["g1"], params["b1"], num_groups)
    h = _ref_single_conv(h, params["w2"], params["g2"], params["b2"], num_groups)
    return h


if __name__ == "__main__":
    # small shapes: N=2, encoder feats 8ch @ 8^3, x 8ch @ 4^3, out_channels=16
    N = 2
    c_enc, c_x = 8, 8
    out_channels = 16
    num_groups = 8
    De = He = We = 8

    key = jax.random.PRNGKey(0)
    keys = jax.random.split(key, 8)
    encoder_features = jax.random.normal(keys[0], (N, c_enc, De, He, We), jnp.float32)
    x = jax.random.normal(keys[1], (N, c_x, De // 2, He // 2, We // 2), jnp.float32)

    in_ch = c_enc + c_x  # concat channel count == Decoder in_channels
    # Deterministic synthetic parameters (PyTorch Conv3d weight layout, no conv
    # bias since 'g' in order; GroupNorm affine params per channel).
    params = {
        "w1": 0.1 * jax.random.normal(keys[2], (out_channels, in_ch, 3, 3, 3), jnp.float32),
        "g1": 1.0 + 0.05 * jax.random.normal(keys[3], (out_channels,), jnp.float32),
        "b1": 0.05 * jax.random.normal(keys[4], (out_channels,), jnp.float32),
        "w2": 0.1 * jax.random.normal(keys[5], (out_channels, out_channels, 3, 3, 3), jnp.float32),
        "g2": 1.0 + 0.05 * jax.random.normal(keys[6], (out_channels,), jnp.float32),
        "b2": 0.05 * jax.random.normal(keys[7], (out_channels,), jnp.float32),
    }

    out = decoder_forward(encoder_features, x, params, num_groups=num_groups)
    out = jax.block_until_ready(out)
    assert out.shape == (N, out_channels, De, He, We)
    assert bool(jnp.all(jnp.isfinite(out)))

    ref = jax.block_until_ready(
        _ref_decoder(encoder_features, x, params, num_groups=num_groups))
    max_err = float(jnp.max(jnp.abs(out - ref)))
    # bf16 matmul inputs vs f32 reference -> small drift; structural errors
    # would be O(1) on GroupNorm-normalized outputs.
    assert max_err < 0.25, f"max abs err {max_err}"

    print("KERNEL_OK")
</pallas_src>

<mosaic_0001>
module attributes {stable_mosaic.version = 11 : i64} {
  func.func @kernel(%arg0: i32, %arg1: memref<1x432x512xbf16, #tpu.memory_space<vmem>>, %arg2: memref<16x432xbf16, #tpu.memory_space<vmem>>, %arg3: memref<16x1xf32, #tpu.memory_space<vmem>>, %arg4: memref<16x1xf32, #tpu.memory_space<vmem>>, %arg5: memref<16x16xf32, #tpu.memory_space<vmem>>, %arg6: memref<1x16x512xf32, #tpu.memory_space<vmem>>) attributes {dimension_semantics = [#tpu.dimension_semantics<parallel>], iteration_bounds = array<i64: 2>, scalar_prefetch = 0 : i64, scratch_operands = 0 : i64, tpu.core_type = #tpu.core_type<tc>, window_params = [{transform_indices = @transform_0, window_bounds = array<i64: 1, 432, 512>}, {pipeline_mode = #tpu.pipeline_mode<synchronous>, transform_indices = @transform_1, window_bounds = array<i64: 16, 432>}, {pipeline_mode = #tpu.pipeline_mode<synchronous>, transform_indices = @transform_2, window_bounds = array<i64: 16, 1>}, {pipeline_mode = #tpu.pipeline_mode<synchronous>, transform_indices = @transform_3, window_bounds = array<i64: 16, 1>}, {pipeline_mode = #tpu.pipeline_mode<synchronous>, transform_indices = @transform_4, window_bounds = array<i64: 16, 16>}, {transform_indices = @transform_5, window_bounds = array<i64: 1, 16, 512>}]} {
    %c0 = arith.constant 0 : index
    %c0_0 = arith.constant 0 : index
    %0 = vector.load %arg2[%c0, %c0_0] : memref<16x432xbf16, #tpu.memory_space<vmem>>, vector<16x432xbf16>
    %c0_1 = arith.constant 0 : index
    %c0_2 = arith.constant 0 : index
    %c0_3 = arith.constant 0 : index
    %1 = vector.load %arg1[%c0_1, %c0_2, %c0_3] : memref<1x432x512xbf16, #tpu.memory_space<vmem>>, vector<1x432x512xbf16>
    %2 = vector.shape_cast %1 : vector<1x432x512xbf16> to vector<432x512xbf16>
    %cst = arith.constant dense<0.000000e+00> : vector<16x512xf32>
    %3 = tpu.matmul %0, %2, %cst {dimension_numbers = #tpu.dot_dimension_numbers<[1], [0], [0], [1], [0, 0, 1, 1], [], []>} : vector<16x432xbf16>, vector<432x512xbf16>, vector<16x512xf32> -> vector<16x512xf32>
    %cst_4 = arith.constant 0.000000e+00 : f32
    %4 = vector.broadcast %cst_4 : f32 to vector<16x512xf32>
    %5 = arith.maximumf %3, %4 : vector<16x512xf32>
    %c0_5 = arith.constant 0 : index
    %c0_6 = arith.constant 0 : index
    %6 = vector.load %arg5[%c0_5, %c0_6] : memref<16x16xf32, #tpu.memory_space<vmem>>, vector<16x16xf32>
    %cst_7 = arith.constant dense<0.000000e+00> : vector<16x512xf32>
    %7 = tpu.matmul %6, %5, %cst_7 {dimension_numbers = #tpu.dot_dimension_numbers<[1], [0], [0], [1], [0, 0, 1, 1], [], []>} : vector<16x16xf32>, vector<16x512xf32>, vector<16x512xf32> -> vector<16x512xf32>
    %c0_8 = arith.constant 0 : index
    %c0_9 = arith.constant 0 : index
    %8 = vector.load %arg5[%c0_8, %c0_9] : memref<16x16xf32, #tpu.memory_space<vmem>>, vector<16x16xf32>
    %9 = arith.mulf %5, %5 : vector<16x512xf32>
    %cst_10 = arith.constant dense<0.000000e+00> : vector<16x512xf32>
    %10 = tpu.matmul %8, %9, %cst_10 {dimension_numbers = #tpu.dot_dimension_numbers<[1], [0], [0], [1], [0, 0, 1, 1], [], []>} : vector<16x16xf32>, vector<16x512xf32>, vector<16x512xf32> -> vector<16x512xf32>
    %cst_11 = arith.constant dense<0.000000e+00> : vector<16xf32>
    %11 = vector.multi_reduction <add>, %7, %cst_11 [1] : vector<16x512xf32> to vector<16xf32>
    %12 = vector.shape_cast %11 : vector<16xf32> to vector<16x1xf32>
    %cst_12 = arith.constant 9.765625E-4 : f32
    %13 = vector.broadcast %cst_12 : f32 to vector<16x1xf32>
    %14 = arith.mulf %12, %13 : vector<16x1xf32>
    %cst_13 = arith.constant dense<0.000000e+00> : vector<16xf32>
    %15 = vector.multi_reduction <add>, %10, %cst_13 [1] : vector<16x512xf32> to vector<16xf32>
    %16 = vector.shape_cast %15 : vector<16xf32> to vector<16x1xf32>
    %cst_14 = arith.constant 9.765625E-4 : f32
    %17 = vector.broadcast %cst_14 : f32 to vector<16x1xf32>
    %18 = arith.mulf %16, %17 : vector<16x1xf32>
    %19 = arith.mulf %14, %14 : vector<16x1xf32>
    %20 = arith.subf %18, %19 : vector<16x1xf32>
    %cst_15 = arith.constant 0.000000e+00 : f32
    %21 = vector.broadcast %cst_15 : f32 to vector<16x1xf32>
    %22 = arith.maximumf %20, %21 : vector<16x1xf32>
    %cst_16 = arith.constant 9.99999974E-6 : f32
    %23 = vector.broadcast %cst_16 : f32 to vector<16x1xf32>
    %24 = arith.addf %22, %23 : vector<16x1xf32>
    %25 = math.rsqrt %24 : vector<16x1xf32>
    %26 = vector.broadcast %14 : vector<16x1xf32> to vector<16x512xf32>
    %27 = arith.subf %5, %26 : vector<16x512xf32>
    %28 = vector.broadcast %25 : vector<16x1xf32> to vector<16x512xf32>
    %29 = arith.mulf %27, %28 : vector<16x512xf32>
    %c0_17 = arith.constant 0 : index
    %c0_18 = arith.constant 0 : index
    %30 = vector.load %arg3[%c0_17, %c0_18] : memref<16x1xf32, #tpu.memory_space<vmem>>, vector<16x1xf32>
    %31 = vector.broadcast %30 : vector<16x1xf32> to vector<16x512xf32>
    %32 = arith.mulf %29, %31 : vector<16x512xf32>
    %c0_19 = arith.constant 0 : index
    %c0_20 = arith.constant 0 : index
    %33 = vector.load %arg4[%c0_19, %c0_20] : memref<16x1xf32, #tpu.memory_space<vmem>>, vector<16x1xf32>
    %34 = vector.broadcast %33 : vector<16x1xf32> to vector<16x512xf32>
    %35 = arith.addf %32, %34 : vector<16x512xf32>
    %c0_21 = arith.constant 0 : index
    %c0_22 = arith.constant 0 : index
    %c0_23 = arith.constant 0 : index
    %36 = vector.load %arg6[%c0_21, %c0_22, %c0_23] : memref<1x16x512xf32, #tpu.memory_space<vmem>>, vector<1x16x512xf32>
    %37 = vector.shape_cast %36 : vector<1x16x512xf32> to vector<16x512xf32>
    %38 = vector.shape_cast %35 : vector<16x512xf32> to vector<1x16x512xf32>
    tpu.vector_store %arg6[%c0_21, %c0_22, %c0_23], %38 {strides = array<i32>} : memref<1x16x512xf32, #tpu.memory_space<vmem>>, vector<1x16x512xf32>,
    return
  }
  func.func @transform_0(%arg0: i32) -> (i32, i32, i32) {
    %c0_i32 = arith.constant 0 : i32
    %c0_i32_0 = arith.constant 0 : i32
    %c0_i32_1 = arith.constant 0 : i32
    return %arg0, %c0_i32, %c0_i32_0 : i32, i32, i32
  }
  func.func @transform_1(%arg0: i32) -> (i32, i32) {
    %c0_i32 = arith.constant 0 : i32
    %c0_i32_0 = arith.constant 0 : i32
    %c0_i32_1 = arith.constant 0 : i32
    return %c0_i32, %c0_i32_0 : i32, i32
  }
  func.func @transform_2(%arg0: i32) -> (i32, i32) {
    %c0_i32 = arith.constant 0 : i32
    %c0_i32_0 = arith.constant 0 : i32
    %c0_i32_1 = arith.constant 0 : i32
    return %c0_i32, %c0_i32_0 : i32, i32
  }
  func.func @transform_3(%arg0: i32) -> (i32, i32) {
    %c0_i32 = arith.constant 0 : i32
    %c0_i32_0 = arith.constant 0 : i32
    %c0_i32_1 = arith.constant 0 : i32
    return %c0_i32, %c0_i32_0 : i32, i32
  }
  func.func @transform_4(%arg0: i32) -> (i32, i32) {
    %c0_i32 = arith.constant 0 : i32
    %c0_i32_0 = arith.constant 0 : i32
    %c0_i32_1 = arith.constant 0 : i32
    return %c0_i32, %c0_i32_0 : i32, i32
  }
  func.func @transform_5(%arg0: i32) -> (i32, i32, i32) {
    %c0_i32 = arith.constant 0 : i32
    %c0_i32_0 = arith.constant 0 : i32
    %c0_i32_1 = arith.constant 0 : i32
    return %arg0, %c0_i32, %c0_i32_0 : i32, i32, i32
  }
}

</mosaic_0001>

<llo_original>
// kernel: tpu_custom_call.1
$region0: #{tpu_custom_call.1}
  #allocation0 [shape = 'u32[]', space=smem, size = 0x4, offset = 0x4, fixed_abs, tag = 'smem constant byte address 0x4 - core index']
  #allocation1 [shape = 'u32[144,128]{1,0:T(1,128)}', space=vmem, size = 0x12000, scoped, tag = 'internal scratch']
  %s0 = inlined_call_operand.hbm [shape: bf16[2,432,512], index: 0, kind: input, shape index: {}]
  %s1 = inlined_call_operand.vmem [shape: bf16[16,432], index: 1, kind: input, shape index: {}]
  %s2 = inlined_call_operand.vmem [shape: f32[16,1], index: 2, kind: input, shape index: {}]
  %s3 = inlined_call_operand.vmem [shape: f32[16,1], index: 3, kind: input, shape index: {}]
  %s4 = inlined_call_operand.vmem [shape: f32[16,16], index: 4, kind: input, shape index: {}]
  %s5 = inlined_call_operand.hbm [shape: f32[2,16,512], index: 5, kind: output, shape index: {}]
  %s6 = sld [smem:[#allocation0]]
  $region57: #{tpu_custom_call.1} parent=0
    _
  %s8 = ssub.s32 1, %s6
  %s9 = scalar_select 0, %s8, %s6
  $region1: #{tpu_custom_call.1} parent=0
    #allocation2 [shape = 'u8[884736]{0}', space=vmem, size = 0xd8000, scoped, tag = 'input window, operand 0']
    #allocation3 [shape = 's32[2]{0}', space=sflag, size = 0x8, scoped, tag = 'scoped memory for tpu_custom_call.1']
    #allocation4 [shape = 's32[2]{0}', space=sflag, size = 0x8, scoped, tag = 'scoped memory for tpu_custom_call.1']
    #allocation5 [shape = 'u8[65536]{0}', space=vmem, size = 0x10000, scoped, tag = 'output window, operand 0']
    %10 = vsyncpa [#allocation3], 0
    %s11 = scalar_lea.sflag [#allocation3], 1
    %12 = vsyncpa %s11, 0
    %13 = vsyncpa [#allocation4], 0
    %s14 = scalar_lea.sflag [#allocation4], 1
    %15 = vsyncpa %s14, 0
    loop: start=0, step=1, limit=4
    $region2: #{tpu_custom_call.1} parent=1 // loop_pre_header
      _
    $region3: #{tpu_custom_call.1} parent=1 // loop_header
      %s17 = sphi 0, %s21
      %p18 = scmp.ge.s32.totalorder %s17, 4
      %s27 = sphi 0, %s29
      %s30 = sphi 0, %s27
      %s31 = sphi 0, %s30
      %s47 = sphi 0, %s31
      %s51 = sphi 0, %s51
      %s53 = sphi 0, %s51
      %s54 = sphi 0, %s53
      %s68 = sphi 0, %s54
      %s72 = sphi 0, %s72
      %s74 = sphi 0, %s72
      %s75 = sphi 0, %s74
      %s89 = sphi 0, %s75
      %s93 = sphi 0, %s93
      %s95 = sphi 0, %s93
      %s96 = sphi 0, %s95
      %s110 = sphi 0, %s96
      %s114 = sphi 0, %s114
      %s116 = sphi 0, %s114
      %s117 = sphi 0, %s116
      %s131 = sphi 0, %s117
      %s137 = sphi 0, %s139
      %s140 = sphi 0, %s137
      %s141 = sphi 0, %s140
      %s157 = sphi 0, %s141
    $region4: #{tpu_custom_call.1} parent=1 // loop_header_branch
      %20 = sbr.rel (%p18) target = $region8
    $region5: #{tpu_custom_call.1} parent=1 // loop_body
      %s22 = ssub.s32 %s17, 1
      %s23 = ssub.s32 %s17, 2
      %s24 = sadd.s32 %s17, 1
      %s25 = ssub.s32 %s17, %s24
      %p26 = scmp.eq.s32.totalorder %s25, 0
      %s28 = sadd.s32 %s27, 1
      %s29 = scalar_select %p26, %s27, %s28
      %p32 = pneg %p26
      %p33 = scmp.eq.s32.totalorder %s17, 1
      %p34 = por %p32, %p33
      %p35 = scmp.ne.s32.totalorder %s27, %s30
      %p36 = scmp.eq.s32.totalorder %s17, 0
      %p37 = por %p35, %p36
      %p38 = scmp.ne.s32.totalorder %s27, %s30
      %p39 = scmp.eq.s32.totalorder %s22, 1
      %p40 = por %p38, %p39
      %p41 = scmp.ne.s32.totalorder %s30, %s31
      %p42 = scmp.eq.s32.totalorder %s22, 0
      %p43 = por %p41, %p42
      %p44 = scmp.ne.s32.totalorder %s30, %s31
      %p45 = scmp.eq.s32.totalorder %s23, 1
      %p46 = por %p44, %p45
      %p48 = scmp.ne.s32.totalorder %s31, %s47
      %p49 = scmp.eq.s32.totalorder %s23, 0
      %p50 = por %p48, %p49
      %s52 = sadd.s32 %s51, 1
      %p55 = scmp.eq.s32.totalorder %s17, 1
      %p56 = scmp.ne.s32.totalorder %s51, %s53
      %p57 = scmp.eq.s32.totalorder %s17, 0
      %p58 = por %p56, %p57
      %p59 = scmp.ne.s32.totalorder %s51, %s53
      %p60 = scmp.eq.s32.totalorder %s22, 1
      %p61 = por %p59, %p60
      %p62 = scmp.ne.s32.totalorder %s53, %s54
      %p63 = scmp.eq.s32.totalorder %s22, 0
      %p64 = por %p62, %p63
      %p65 = scmp.ne.s32.totalorder %s53, %s54
      %p66 = scmp.eq.s32.totalorder %s23, 1
      %p67 = por %p65, %p66
      %p69 = scmp.ne.s32.totalorder %s54, %s68
      %p70 = scmp.eq.s32.totalorder %s23, 0
      %p71 = por %p69, %p70
      %s73 = sadd.s32 %s72, 1
      %p76 = scmp.eq.s32.totalorder %s17, 1
      %p77 = scmp.ne.s32.totalorder %s72, %s74
      %p78 = scmp.eq.s32.totalorder %s17, 0
      %p79 = por %p77, %p78
      %p80 = scmp.ne.s32.totalorder %s72, %s74
      %p81 = scmp.eq.s32.totalorder %s22, 1
      %p82 = por %p80, %p81
      %p83 = scmp.ne.s32.totalorder %s74, %s75
      %p84 = scmp.eq.s32.totalorder %s22, 0
      %p85 = por %p83, %p84
      %p86 = scmp.ne.s32.totalorder %s74, %s75
      %p87 = scmp.eq.s32.totalorder %s23, 1
      %p88 = por %p86, %p87
      %p90 = scmp.ne.s32.totalorder %s75, %s89
      %p91 = scmp.eq.s32.totalorder %s23, 0
      %p92 = por %p90, %p91
      %s94 = sadd.s32 %s93, 1
      %p97 = scmp.eq.s32.totalorder %s17, 1
      %p98 = scmp.ne.s32.totalorder %s93, %s95
      %p99 = scmp.eq.s32.totalorder %s17, 0
      %p100 = por %p98, %p99
      %p101 = scmp.ne.s32.totalorder %s93, %s95
      %p102 = scmp.eq.s32.totalorder %s22, 1
      %p103 = por %p101, %p102
      %p104 = scmp.ne.s32.totalorder %s95, %s96
      %p105 = scmp.eq.s32.totalorder %s22, 0
      %p106 = por %p104, %p105
      %p107 = scmp.ne.s32.totalorder %s95, %s96
      %p108 = scmp.eq.s32.totalorder %s23, 1
      %p109 = por %p107, %p108
      %p111 = scmp.ne.s32.totalorder %s96, %s110
      %p112 = scmp.eq.s32.totalorder %s23, 0
      %p113 = por %p111, %p112
      %s115 = sadd.s32 %s114, 1
      %p118 = scmp.eq.s32.totalorder %s17, 1
      %p119 = scmp.ne.s32.totalorder %s114, %s116
      %p120 = scmp.eq.s32.totalorder %s17, 0
      %p121 = por %p119, %p120
      %p122 = scmp.ne.s32.totalorder %s114, %s116
      %p123 = scmp.eq.s32.totalorder %s22, 1
      %p124 = por %p122, %p123
      %p125 = scmp.ne.s32.totalorder %s116, %s117
      %p126 = scmp.eq.s32.totalorder %s22, 0
      %p127 = por %p125, %p126
      %p128 = scmp.ne.s32.totalorder %s116, %s117
      %p129 = scmp.eq.s32.totalorder %s23, 1
      %p130 = por %p128, %p129
      %p132 = scmp.ne.s32.totalorder %s117, %s131
      %p133 = scmp.eq.s32.totalorder %s23, 0
      %p134 = por %p132, %p133
      %s135 = ssub.s32 %s17, %s24
      %p136 = scmp.eq.s32.totalorder %s135, 0
      %s138 = sadd.s32 %s137, 1
      %s139 = scalar_select %p136, %s137, %s138
      %p142 = pneg %p136
      %p143 = scmp.eq.s32.totalorder %s17, 1
      %p144 = por %p142, %p143
      %p145 = scmp.ne.s32.totalorder %s137, %s140
      %p146 = scmp.eq.s32.totalorder %s17, 0
      %p147 = por %p145, %p146
      %p148 = scmp.ne.s32.totalorder %s137, %s140
      %p149 = scmp.eq.s32.totalorder %s22, 1
      %p150 = por %p148, %p149
      %p151 = scmp.ne.s32.totalorder %s140, %s141
      %p152 = scmp.eq.s32.totalorder %s22, 0
      %p153 = por %p151, %p152
      %p154 = scmp.ne.s32.totalorder %s140, %s141
      %p155 = scmp.eq.s32.totalorder %s23, 1
      %p156 = por %p154, %p155
      %p158 = scmp.ne.s32.totalorder %s141, %s157
      %p159 = scmp.eq.s32.totalorder %s23, 0
      %p160 = por %p158, %p159
      %p161 = scmp.le.s32.totalorder 1, %s17
      %p162 = scmp.lt.s32.totalorder %s17, 3
      %p163 = pnand %p161, %p162
      %p164 = pneg %p163
      // Predicated region
      $region9: #{tpu_custom_call.1} parent=5 // pred_check
        _
      $region10: #{tpu_custom_call.1} parent=5 // pred_check_branch
        %166 = sbr.rel (%p163) target = $region12
      $region11: #{tpu_custom_call.1} parent=5 // pred_region
        %s167 = ssub.s32 %s17, 1
        // Predicated region
        $region13: #{tpu_custom_call.1} parent=11 // pred_check
          %p168 = pneg %p64
        $region14: #{tpu_custom_call.1} parent=11 // pred_check_branch
          %170 = sbr.rel (%p168) target = $region16
        $region15: #{tpu_custom_call.1} parent=11 // pred_region
          _
        $region16: #{tpu_custom_call.1} parent=11 // pred_fallthru
          _
        // Predicated region
        $region17: #{tpu_custom_call.1} parent=11 // pred_check
          %p171 = pneg %p85
        $region18: #{tpu_custom_call.1} parent=11 // pred_check_branch
          %173 = sbr.rel (%p171) target = $region20
        $region19: #{tpu_custom_call.1} parent=11 // pred_region
          _
        $region20: #{tpu_custom_call.1} parent=11 // pred_fallthru
          _
        // Predicated region
        $region21: #{tpu_custom_call.1} parent=11 // pred_check
          %p174 = pneg %p106
        $region22: #{tpu_custom_call.1} parent=11 // pred_check_branch
          %176 = sbr.rel (%p174) target = $region24
        $region23: #{tpu_custom_call.1} parent=11 // pred_region
          _
        $region24: #{tpu_custom_call.1} parent=11 // pred_fallthru
          _
        // Predicated region
        $region25: #{tpu_custom_call.1} parent=11 // pred_check
          %p177 = pneg %p127
        $region26: #{tpu_custom_call.1} parent=11 // pred_check_branch
          %179 = sbr.rel (%p177) target = $region28
        $region27: #{tpu_custom_call.1} parent=11 // pred_region
          _
        $region28: #{tpu_custom_call.1} parent=11 // pred_fallthru
          _
      $region12: #{tpu_custom_call.1} parent=5 // pred_fallthru
        _
      %p180 = scmp.lt.s32.totalorder %s17, 2
      // Predicated region
      $region29: #{tpu_custom_call.1} parent=5 // pred_check
        %p181 = pneg %p180
      $region30: #{tpu_custom_call.1} parent=5 // pred_check_branch
        %183 = sbr.rel (%p181) target = $region32
      $region31: #{tpu_custom_call.1} parent=5 // pred_region
        // Predicated region
        $region33: #{tpu_custom_call.1} parent=31 // pred_check
          %p184 = pneg %p37
        $region34: #{tpu_custom_call.1} parent=31 // pred_check_branch
          %186 = sbr.rel (%p184) target = $region36
        $region35: #{tpu_custom_call.1} parent=31 // pred_region
          %s187 = sand.u32 %s27, 1
          %s188 = scalar_lea.sflag [#allocation3], %s187
          %s189 = sand.u32 %s27, 1
          %s190 = smul.addr %s189, 864
          %s191 = scalar_lea.vmem [#allocation2], %s190
          %s193 = ssub.s32 13824, 13824
          %194 = vsyncadd %s188, %s193
          %s195 = smul.addr %s17, 216
          %s196 = smul.addr %s195, 64
          %s197 = scalar_lea.hbm %s0, %s196
          %s198 = sshll.u32 %s191, 4
          %s199 = int_to_ptr.vmem [resolvable:$true] %s198
          %204 = dma.hbm_to_vmem [thread:$0]  %s197, 13824, %s199, %s188, 256, 256, 16
        $region36: #{tpu_custom_call.1} parent=31 // pred_fallthru
          _
      $region32: #{tpu_custom_call.1} parent=5 // pred_fallthru
        _
      %p205 = scmp.le.s32.totalorder 1, %s17
      %p206 = scmp.lt.s32.totalorder %s17, 3
      %p207 = pnand %p205, %p206
      %p208 = pneg %p207
      // Predicated region
      $region37: #{tpu_custom_call.1} parent=5 // pred_check
        _
      $region38: #{tpu_custom_call.1} parent=5 // pred_check_branch
        %210 = sbr.rel (%p207) target = $region40
      $region39: #{tpu_custom_call.1} parent=5 // pred_region
        %s211 = ssub.s32 %s17, 1
        %s212 = sand.u32 %s30, 1
        %s213 = scalar_lea.sflag [#allocation3], %s212
        %s214 = sand.u32 %s30, 1
        %s215 = smul.addr %s214, 864
        %s216 = scalar_lea.vmem [#allocation2], %s215
        // Predicated region
        $region41: #{tpu_custom_call.1} parent=39 // pred_check
          %p217 = pneg %p43
        $region42: #{tpu_custom_call.1} parent=39 // pred_check_branch
          %219 = sbr.rel (%p217) target = $region44
        $region43: #{tpu_custom_call.1} parent=39 // pred_region
          %220 = dma.done %s213, 13824
        $region44: #{tpu_custom_call.1} parent=39 // pred_fallthru
          _
        %s221 = sand.u32 %s30, 1
        %s222 = scalar_lea.sflag [#allocation3], %s221
        %s223 = sand.u32 %s30, 1
        %s224 = smul.addr %s223, 864
        %s225 = scalar_lea.vmem [#allocation2], %s224
        %p226 = pneg %p43
        %p227 = pneg %p40
        %p228 = pneg %p64
        %p229 = pneg %p61
        %p230 = pneg %p85
        %p231 = pneg %p82
        %p232 = pneg %p106
        %p233 = pneg %p103
        %p234 = pneg %p127
        %p235 = pneg %p124
        %p236 = pneg %p153
        %p237 = pneg %p150
        %s238 = sand.u32 %s140, 1
        %s239 = scalar_lea.sflag [#allocation4], %s238
        %s240 = sand.u32 %s140, 1
        %s241 = smul.addr %s240, 64
        %s242 = scalar_lea.vmem [#allocation5], %s241
        %v244 = vld [vmem:[%s1] sm:$0xff]
        %v245 = vld [vmem:[%s1 + $0x8] sm:$0xff]
        %v246 = vld [vmem:[%s1 + $0x10] sm:$0xff]
        %v247 = vld [vmem:[%s1 + $0x18] sm:$0xff]
        %v248 = vld [vmem:[%s216] sm:$0xff]
        %v249 = vld [vmem:[%s216 + $0x8] sm:$0xff]
        %v250 = vld [vmem:[%s216 + $0x10] sm:$0xff]
        %v251 = vld [vmem:[%s216 + $0x18] sm:$0xff]
        %v252 = vld [vmem:[%s216 + $0x20] sm:$0xff]
        %v253 = vld [vmem:[%s216 + $0x28] sm:$0xff]
        %v254 = vld [vmem:[%s216 + $0x30] sm:$0xff]
        %v255 = vld [vmem:[%s216 + $0x38] sm:$0xff]
        %v256 = vld [vmem:[%s216 + $0x40] sm:$0xff]
        %v257 = vld [vmem:[%s216 + $0x48] sm:$0xff]
        %v258 = vld [vmem:[%s216 + $0x50] sm:$0xff]
        %v259 = vld [vmem:[%s216 + $0x58] sm:$0xff]
        %v260 = vld [vmem:[%s216 + $0x60] sm:$0xff]
        %v261 = vld [vmem:[%s216 + $0x68] sm:$0xff]
        %v262 = vld [vmem:[%s216 + $0x70] sm:$0xff]
        %v263 = vld [vmem:[%s216 + $0x78] sm:$0xff]
        %v264 = vld [vmem:[%s216 + $0x80] sm:$0xff]
        %v265 = vld [vmem:[%s216 + $0x88] sm:$0xff]
        %v266 = vld [vmem:[%s216 + $0x90] sm:$0xff]
        %v267 = vld [vmem:[%s216 + $0x98] sm:$0xff]
        %v268 = vld [vmem:[%s216 + $0xa0] sm:$0xff]
        %v269 = vld [vmem:[%s216 + $0xa8] sm:$0xff]
        %v270 = vld [vmem:[%s216 + $0xb0] sm:$0xff]
        %v271 = vld [vmem:[%s216 + $0xb8] sm:$0xff]
        %v272 = vld [vmem:[%s216 + $0xc0] sm:$0xff]
        %v273 = vld [vmem:[%s216 + $0xc8] sm:$0xff]
        %v274 = vld [vmem:[%s216 + $0xd0] sm:$0xff]
        %v275 = vld [vmem:[%s216 + $0xd8] sm:$0xff]
        %v276 = vld [vmem:[%s216 + $0xe0] sm:$0xff]
        %v277 = vld [vmem:[%s216 + $0xe8] sm:$0xff]
        %v278 = vld [vmem:[%s216 + $0xf0] sm:$0xff]
        %v279 = vld [vmem:[%s216 + $0xf8] sm:$0xff]
        %v280 = vld [vmem:[%s216 + $0x100] sm:$0xff]
        %v281 = vld [vmem:[%s216 + $0x108] sm:$0xff]
        %v282 = vld [vmem:[%s216 + $0x110] sm:$0xff]
        %v283 = vld [vmem:[%s216 + $0x118] sm:$0xff]
        %v284 = vld [vmem:[%s216 + $0x120] sm:$0xff]
        %v285 = vld [vmem:[%s216 + $0x128] sm:$0xff]
        %v286 = vld [vmem:[%s216 + $0x130] sm:$0xff]
        %v287 = vld [vmem:[%s216 + $0x138] sm:$0xff]
        %v288 = vld [vmem:[%s216 + $0x140] sm:$0xff]
        %v289 = vld [vmem:[%s216 + $0x148] sm:$0xff]
        %v290 = vld [vmem:[%s216 + $0x150] sm:$0xff]
        %v291 = vld [vmem:[%s216 + $0x158] sm:$0xff]
        %v292 = vld [vmem:[%s216 + $0x160] sm:$0xff]
        %v293 = vld [vmem:[%s216 + $0x168] sm:$0xff]
        %v294 = vld [vmem:[%s216 + $0x170] sm:$0xff]
        %v295 = vld [vmem:[%s216 + $0x178] sm:$0xff]
        %v296 = vld [vmem:[%s216 + $0x180] sm:$0xff]
        %v297 = vld [vmem:[%s216 + $0x188] sm:$0xff]
        %v298 = vld [vmem:[%s216 + $0x190] sm:$0xff]
        %v299 = vld [vmem:[%s216 + $0x198] sm:$0xff]
        %v300 = vld [vmem:[%s216 + $0x1a0] sm:$0xff]
        %v301 = vld [vmem:[%s216 + $0x1a8] sm:$0xff]
        %v302 = vld [vmem:[%s216 + $0x1b0] sm:$0xff]
        %v303 = vld [vmem:[%s216 + $0x1b8] sm:$0xff]
        %v304 = vld [vmem:[%s216 + $0x1c0] sm:$0xff]
        %v305 = vld [vmem:[%s216 + $0x1c8] sm:$0xff]
        %v306 = vld [vmem:[%s216 + $0x1d0] sm:$0xff]
        %v307 = vld [vmem:[%s216 + $0x1d8] sm:$0xff]
        %v308 = vld [vmem:[%s216 + $0x1e0] sm:$0xff]
        %v309 = vld [vmem:[%s216 + $0x1e8] sm:$0xff]
        %v310 = vld [vmem:[%s216 + $0x1f0] sm:$0xff]
        %v311 = vld [vmem:[%s216 + $0x1f8] sm:$0xff]
        %v312 = vld [vmem:[%s216 + $0x200] sm:$0xff]
        %v313 = vld [vmem:[%s216 + $0x208] sm:$0xff]
        %v314 = vld [vmem:[%s216 + $0x210] sm:$0xff]
        %v315 = vld [vmem:[%s216 + $0x218] sm:$0xff]
        %v316 = vld [vmem:[%s216 + $0x220] sm:$0xff]
        %v317 = vld [vmem:[%s216 + $0x228] sm:$0xff]
        %v318 = vld [vmem:[%s216 + $0x230] sm:$0xff]
        %v319 = vld [vmem:[%s216 + $0x238] sm:$0xff]
        %v320 = vld [vmem:[%s216 + $0x240] sm:$0xff]
        %v321 = vld [vmem:[%s216 + $0x248] sm:$0xff]
        %v322 = vld [vmem:[%s216 + $0x250] sm:$0xff]
        %v323 = vld [vmem:[%s216 + $0x258] sm:$0xff]
        %v324 = vld [vmem:[%s216 + $0x260] sm:$0xff]
        %v325 = vld [vmem:[%s216 + $0x268] sm:$0xff]
        %v326 = vld [vmem:[%s216 + $0x270] sm:$0xff]
        %v327 = vld [vmem:[%s216 + $0x278] sm:$0xff]
        %v328 = vld [vmem:[%s216 + $0x280] sm:$0xff]
        %v329 = vld [vmem:[%s216 + $0x288] sm:$0xff]
        %v330 = vld [vmem:[%s216 + $0x290] sm:$0xff]
        %v331 = vld [vmem:[%s216 + $0x298] sm:$0xff]
        %v332 = vld [vmem:[%s216 + $0x2a0] sm:$0xff]
        %v333 = vld [vmem:[%s216 + $0x2a8] sm:$0xff]
        %v334 = vld [vmem:[%s216 + $0x2b0] sm:$0xff]
        %v335 = vld [vmem:[%s216 + $0x2b8] sm:$0xff]
        %v336 = vld [vmem:[%s216 + $0x2c0] sm:$0xff]
        %v337 = vld [vmem:[%s216 + $0x2c8] sm:$0xff]
        %v338 = vld [vmem:[%s216 + $0x2d0] sm:$0xff]
        %v339 = vld [vmem:[%s216 + $0x2d8] sm:$0xff]
        %v340 = vld [vmem:[%s216 + $0x2e0] sm:$0xff]
        %v341 = vld [vmem:[%s216 + $0x2e8] sm:$0xff]
        %v342 = vld [vmem:[%s216 + $0x2f0] sm:$0xff]
        %v343 = vld [vmem:[%s216 + $0x2f8] sm:$0xff]
        %v344 = vld [vmem:[%s216 + $0x300] sm:$0xff]
        %v345 = vld [vmem:[%s216 + $0x308] sm:$0xff]
        %v346 = vld [vmem:[%s216 + $0x310] sm:$0xff]
        %v347 = vld [vmem:[%s216 + $0x318] sm:$0xff]
        %v348 = vld [vmem:[%s216 + $0x320] sm:$0xff]
        %v349 = vld [vmem:[%s216 + $0x328] sm:$0xff]
        %v350 = vld [vmem:[%s216 + $0x330] sm:$0xff]
        %v351 = vld [vmem:[%s216 + $0x338] sm:$0xff]
        %v352 = vld [vmem:[%s216 + $0x340] sm:$0xff]
        %v353 = vld [vmem:[%s216 + $0x348] sm:$0xff]
        %v354 = vld [vmem:[%s216 + $0x350] sm:$0xff]
        %v355 = vld [vmem:[%s216 + $0x358] sm:$0xff]
        %v360 = vunpack.c.l.b16 %v244
        %v361 = vunpack.c.h.b16 %v244
        %v362 = vunpack.c.l.b16 %v245
        %v363 = vunpack.c.h.b16 %v245
        %v364 = vunpack.c.l.b16 %v246
        %v365 = vunpack.c.h.b16 %v246
        %v366 = vunpack.c.l.b16 %v247
        %v367 = vunpack.c.h.b16 %v247
        %v368 = vpack.c.b16 %v364, %v360
        %v369 = vpack.c.b16 %v365, %v361
        %v370 = vpack.c.b16 %v366, %v362
        %v371 = vpack.c.b16 %v367, %v363
        %v483 = vunpack.c.l.b16 %v248
        %v484 = vunpack.c.h.b16 %v248
        %v485 = vunpack.c.l.b16 %v249
        %v486 = vunpack.c.h.b16 %v249
        %v487 = vunpack.c.l.b16 %v250
        %v488 = vunpack.c.h.b16 %v250
        %v489 = vunpack.c.l.b16 %v251
        %v490 = vunpack.c.h.b16 %v251
        %v491 = vunpack.c.l.b16 %v252
        %v492 = vunpack.c.h.b16 %v252
        %v493 = vunpack.c.l.b16 %v253
        %v494 = vunpack.c.h.b16 %v253
        %v495 = vunpack.c.l.b16 %v254
        %v496 = vunpack.c.h.b16 %v254
        %v497 = vunpack.c.l.b16 %v255
        %v498 = vunpack.c.h.b16 %v255
        %v499 = vunpack.c.l.b16 %v256
        %v500 = vunpack.c.h.b16 %v256
        %v501 = vunpack.c.l.b16 %v257
        %v502 = vunpack.c.h.b16 %v257
        %v503 = vunpack.c.l.b16 %v258
        %v504 = vunpack.c.h.b16 %v258
        %v505 = vunpack.c.l.b16 %v259
        %v506 = vunpack.c.h.b16 %v259
        %v507 = vunpack.c.l.b16 %v260
        %v508 = vunpack.c.h.b16 %v260
        %v509 = vunpack.c.l.b16 %v261
        %v510 = vunpack.c.h.b16 %v261
        %v511 = vunpack.c.l.b16 %v262
        %v512 = vunpack.c.h.b16 %v262
        %v513 = vunpack.c.l.b16 %v263
        %v514 = vunpack.c.h.b16 %v263
        %v515 = vunpack.c.l.b16 %v264
        %v516 = vunpack.c.h.b16 %v264
        %v517 = vunpack.c.l.b16 %v265
        %v518 = vunpack.c.h.b16 %v265
        %v519 = vunpack.c.l.b16 %v266
        %v520 = vunpack.c.h.b16 %v266
        %v521 = vunpack.c.l.b16 %v267
        %v522 = vunpack.c.h.b16 %v267
        %v523 = vunpack.c.l.b16 %v268
        %v524 = vunpack.c.h.b16 %v268
        %v525 = vunpack.c.l.b16 %v269
        %v526 = vunpack.c.h.b16 %v269
        %v527 = vunpack.c.l.b16 %v270
        %v528 = vunpack.c.h.b16 %v270
        %v529 = vunpack.c.l.b16 %v271
        %v530 = vunpack.c.h.b16 %v271
        %v531 = vunpack.c.l.b16 %v272
        %v532 = vunpack.c.h.b16 %v272
        %v533 = vunpack.c.l.b16 %v273
        %v534 = vunpack.c.h.b16 %v273
        %v535 = vunpack.c.l.b16 %v274
        %v536 = vunpack.c.h.b16 %v274
        %v537 = vunpack.c.l.b16 %v275
        %v538 = vunpack.c.h.b16 %v275
        %v539 = vunpack.c.l.b16 %v276
        %v540 = vunpack.c.h.b16 %v276
        %v541 = vunpack.c.l.b16 %v277
        %v542 = vunpack.c.h.b16 %v277
        %v543 = vunpack.c.l.b16 %v278
        %v544 = vunpack.c.h.b16 %v278
        %v545 = vunpack.c.l.b16 %v279
        %v546 = vunpack.c.h.b16 %v279
        %v547 = vunpack.c.l.b16 %v280
        %v548 = vunpack.c.h.b16 %v280
        %v549 = vunpack.c.l.b16 %v281
        %v550 = vunpack.c.h.b16 %v281
        %v551 = vunpack.c.l.b16 %v282
        %v552 = vunpack.c.h.b16 %v282
        %v553 = vunpack.c.l.b16 %v283
        %v554 = vunpack.c.h.b16 %v283
        %v555 = vunpack.c.l.b16 %v284
        %v556 = vunpack.c.h.b16 %v284
        %v557 = vunpack.c.l.b16 %v285
        %v558 = vunpack.c.h.b16 %v285
        %v559 = vunpack.c.l.b16 %v286
        %v560 = vunpack.c.h.b16 %v286
        %v561 = vunpack.c.l.b16 %v287
        %v562 = vunpack.c.h.b16 %v287
        %v563 = vunpack.c.l.b16 %v288
        %v564 = vunpack.c.h.b16 %v288
        %v565 = vunpack.c.l.b16 %v289
        %v566 = vunpack.c.h.b16 %v289
        %v567 = vunpack.c.l.b16 %v290
        %v568 = vunpack.c.h.b16 %v290
        %v569 = vunpack.c.l.b16 %v291
        %v570 = vunpack.c.h.b16 %v291
        %v571 = vunpack.c.l.b16 %v292
        %v572 = vunpack.c.h.b16 %v292
        %v573 = vunpack.c.l.b16 %v293
        %v574 = vunpack.c.h.b16 %v293
        %v575 = vunpack.c.l.b16 %v294
        %v576 = vunpack.c.h.b16 %v294
        %v577 = vunpack.c.l.b16 %v295
        %v578 = vunpack.c.h.b16 %v295
        %v579 = vunpack.c.l.b16 %v296
        %v580 = vunpack.c.h.b16 %v296
        %v581 = vunpack.c.l.b16 %v297
        %v582 = vunpack.c.h.b16 %v297
        %v583 = vunpack.c.l.b16 %v298
        %v584 = vunpack.c.h.b16 %v298
        %v585 = vunpack.c.l.b16 %v299
        %v586 = vunpack.c.h.b16 %v299
        %v587 = vunpack.c.l.b16 %v300
        %v588 = vunpack.c.h.b16 %v300
        %v589 = vunpack.c.l.b16 %v301
        %v590 = vunpack.c.h.b16 %v301
        %v591 = vunpack.c.l.b16 %v302
        %v592 = vunpack.c.h.b16 %v302
        %v593 = vunpack.c.l.b16 %v303
        %v594 = vunpack.c.h.b16 %v303
        %v595 = vunpack.c.l.b16 %v304
        %v596 = vunpack.c.h.b16 %v304
        %v597 = vunpack.c.l.b16 %v305
        %v598 = vunpack.c.h.b16 %v305
        %v599 = vunpack.c.l.b16 %v306
        %v600 = vunpack.c.h.b16 %v306
        %v601 = vunpack.c.l.b16 %v307
        %v602 = vunpack.c.h.b16 %v307
        %v603 = vunpack.c.l.b16 %v308
        %v604 = vunpack.c.h.b16 %v308
        %v605 = vunpack.c.l.b16 %v309
        %v606 = vunpack.c.h.b16 %v309
        %v607 = vunpack.c.l.b16 %v310
        %v608 = vunpack.c.h.b16 %v310
        %v609 = vunpack.c.l.b16 %v311
        %v610 = vunpack.c.h.b16 %v311
        %v611 = vunpack.c.l.b16 %v312
        %v612 = vunpack.c.h.b16 %v312
        %v613 = vunpack.c.l.b16 %v313
        %v614 = vunpack.c.h.b16 %v313
        %v615 = vunpack.c.l.b16 %v314
        %v616 = vunpack.c.h.b16 %v314
        %v617 = vunpack.c.l.b16 %v315
        %v618 = vunpack.c.h.b16 %v315
        %v619 = vunpack.c.l.b16 %v316
        %v620 = vunpack.c.h.b16 %v316
        %v621 = vunpack.c.l.b16 %v317
        %v622 = vunpack.c.h.b16 %v317
        %v623 = vunpack.c.l.b16 %v318
        %v624 = vunpack.c.h.b16 %v318
        %v625 = vunpack.c.l.b16 %v319
        %v626 = vunpack.c.h.b16 %v319
        %v627 = vunpack.c.l.b16 %v320
        %v628 = vunpack.c.h.b16 %v320
        %v629 = vunpack.c.l.b16 %v321
        %v630 = vunpack.c.h.b16 %v321
        %v631 = vunpack.c.l.b16 %v322
        %v632 = vunpack.c.h.b16 %v322
        %v633 = vunpack.c.l.b16 %v323
        %v634 = vunpack.c.h.b16 %v323
        %v635 = vunpack.c.l.b16 %v324
        %v636 = vunpack.c.h.b16 %v324
        %v637 = vunpack.c.l.b16 %v325
        %v638 = vunpack.c.h.b16 %v325
        %v639 = vunpack.c.l.b16 %v326
        %v640 = vunpack.c.h.b16 %v326
        %v641 = vunpack.c.l.b16 %v327
        %v642 = vunpack.c.h.b16 %v327
        %v643 = vunpack.c.l.b16 %v328
        %v644 = vunpack.c.h.b16 %v328
        %v645 = vunpack.c.l.b16 %v329
        %v646 = vunpack.c.h.b16 %v329
        %v647 = vunpack.c.l.b16 %v330
        %v648 = vunpack.c.h.b16 %v330
        %v649 = vunpack.c.l.b16 %v331
        %v650 = vunpack.c.h.b16 %v331
        %v651 = vunpack.c.l.b16 %v332
        %v652 = vunpack.c.h.b16 %v332
        %v653 = vunpack.c.l.b16 %v333
        %v654 = vunpack.c.h.b16 %v333
        %v655 = vunpack.c.l.b16 %v334
        %v656 = vunpack.c.h.b16 %v334
        %v657 = vunpack.c.l.b16 %v335
        %v658 = vunpack.c.h.b16 %v335
        %v659 = vunpack.c.l.b16 %v336
        %v660 = vunpack.c.h.b16 %v336
        %v661 = vunpack.c.l.b16 %v337
        %v662 = vunpack.c.h.b16 %v337
        %v663 = vunpack.c.l.b16 %v338
        %v664 = vunpack.c.h.b16 %v338
        %v665 = vunpack.c.l.b16 %v339
        %v666 = vunpack.c.h.b16 %v339
        %v667 = vunpack.c.l.b16 %v340
        %v668 = vunpack.c.h.b16 %v340
        %v669 = vunpack.c.l.b16 %v341
        %v670 = vunpack.c.h.b16 %v341
        %v671 = vunpack.c.l.b16 %v342
        %v672 = vunpack.c.h.b16 %v342
        %v673 = vunpack.c.l.b16 %v343
        %v674 = vunpack.c.h.b16 %v343
        %v675 = vunpack.c.l.b16 %v344
        %v676 = vunpack.c.h.b16 %v344
        %v677 = vunpack.c.l.b16 %v345
        %v678 = vunpack.c.h.b16 %v345
        %v679 = vunpack.c.l.b16 %v346
        %v680 = vunpack.c.h.b16 %v346
        %v681 = vunpack.c.l.b16 %v347
        %v682 = vunpack.c.h.b16 %v347
        %v683 = vunpack.c.l.b16 %v348
        %v684 = vunpack.c.h.b16 %v348
        %v685 = vunpack.c.l.b16 %v349
        %v686 = vunpack.c.h.b16 %v349
        %v687 = vunpack.c.l.b16 %v350
        %v688 = vunpack.c.h.b16 %v350
        %v689 = vunpack.c.l.b16 %v351
        %v690 = vunpack.c.h.b16 %v351
        %v691 = vunpack.c.l.b16 %v352
        %v692 = vunpack.c.h.b16 %v352
        %v693 = vunpack.c.l.b16 %v353
        %v694 = vunpack.c.h.b16 %v353
        %v695 = vunpack.c.l.b16 %v354
        %v696 = vunpack.c.h.b16 %v354
        %v697 = vunpack.c.l.b16 %v355
        %v698 = vunpack.c.h.b16 %v355
        %v699 = vpack.c.b16 %v487, %v483
        %v700 = vpack.c.b16 %v488, %v484
        %v701 = vpack.c.b16 %v489, %v485
        %v702 = vpack.c.b16 %v490, %v486
        %v703 = vpack.c.b16 %v495, %v491
        %v704 = vpack.c.b16 %v496, %v492
        %v705 = vpack.c.b16 %v497, %v493
        %v706 = vpack.c.b16 %v498, %v494
        %v707 = vpack.c.b16 %v503, %v499
        %v708 = vpack.c.b16 %v504, %v500
        %v709 = vpack.c.b16 %v505, %v501
        %v710 = vpack.c.b16 %v506, %v502
        %v711 = vpack.c.b16 %v511, %v507
        %v712 = vpack.c.b16 %v512, %v508
        %v713 = vpack.c.b16 %v513, %v509
        %v714 = vpack.c.b16 %v514, %v510
        %v715 = vpack.c.b16 %v519, %v515
        %v716 = vpack.c.b16 %v520, %v516
        %v717 = vpack.c.b16 %v521, %v517
        %v718 = vpack.c.b16 %v522, %v518
        %v719 = vpack.c.b16 %v527, %v523
        %v720 = vpack.c.b16 %v528, %v524
        %v721 = vpack.c.b16 %v529, %v525
        %v722 = vpack.c.b16 %v530, %v526
        %v723 = vpack.c.b16 %v535, %v531
        %v724 = vpack.c.b16 %v536, %v532
        %v725 = vpack.c.b16 %v537, %v533
        %v726 = vpack.c.b16 %v538, %v534
        %v727 = vpack.c.b16 %v543, %v539
        %v728 = vpack.c.b16 %v544, %v540
        %v729 = vpack.c.b16 %v545, %v541
        %v730 = vpack.c.b16 %v546, %v542
        %v731 = vpack.c.b16 %v551, %v547
        %v732 = vpack.c.b16 %v552, %v548
        %v733 = vpack.c.b16 %v553, %v549
        %v734 = vpack.c.b16 %v554, %v550
        %v735 = vpack.c.b16 %v559, %v555
        %v736 = vpack.c.b16 %v560, %v556
        %v737 = vpack.c.b16 %v561, %v557
        %v738 = vpack.c.b16 %v562, %v558
        %v739 = vpack.c.b16 %v567, %v563
        %v740 = vpack.c.b16 %v568, %v564
        %v741 = vpack.c.b16 %v569, %v565
        %v742 = vpack.c.b16 %v570, %v566
        %v743 = vpack.c.b16 %v575, %v571
        %v744 = vpack.c.b16 %v576, %v572
        %v745 = vpack.c.b16 %v577, %v573
        %v746 = vpack.c.b16 %v578, %v574
        %v747 = vpack.c.b16 %v583, %v579
        %v748 = vpack.c.b16 %v584, %v580
        %v749 = vpack.c.b16 %v585, %v581
        %v750 = vpack.c.b16 %v586, %v582
        %v751 = vpack.c.b16 %v591, %v587
        %v752 = vpack.c.b16 %v592, %v588
        %v753 = vpack.c.b16 %v593, %v589
        %v754 = vpack.c.b16 %v594, %v590
        %v755 = vpack.c.b16 %v599, %v595
        %v756 = vpack.c.b16 %v600, %v596
        %v757 = vpack.c.b16 %v601, %v597
        %v758 = vpack.c.b16 %v602, %v598
        %v759 = vpack.c.b16 %v607, %v603
        %v760 = vpack.c.b16 %v608, %v604
        %v761 = vpack.c.b16 %v609, %v605
        %v762 = vpack.c.b16 %v610, %v606
        %v763 = vpack.c.b16 %v615, %v611
        %v764 = vpack.c.b16 %v616, %v612
        %v765 = vpack.c.b16 %v617, %v613
        %v766 = vpack.c.b16 %v618, %v614
        %v767 = vpack.c.b16 %v623, %v619
        %v768 = vpack.c.b16 %v624, %v620
        %v769 = vpack.c.b16 %v625, %v621
        %v770 = vpack.c.b16 %v626, %v622
        %v771 = vpack.c.b16 %v631, %v627
        %v772 = vpack.c.b16 %v632, %v628
        %v773 = vpack.c.b16 %v633, %v629
        %v774 = vpack.c.b16 %v634, %v630
        %v775 = vpack.c.b16 %v639, %v635
        %v776 = vpack.c.b16 %v640, %v636
        %v777 = vpack.c.b16 %v641, %v637
        %v778 = vpack.c.b16 %v642, %v638
        %v779 = vpack.c.b16 %v647, %v643
        %v780 = vpack.c.b16 %v648, %v644
        %v781 = vpack.c.b16 %v649, %v645
        %v782 = vpack.c.b16 %v650, %v646
        %v783 = vpack.c.b16 %v655, %v651
        %v784 = vpack.c.b16 %v656, %v652
        %v785 = vpack.c.b16 %v657, %v653
        %v786 = vpack.c.b16 %v658, %v654
        %v787 = vpack.c.b16 %v663, %v659
        %v788 = vpack.c.b16 %v664, %v660
        %v789 = vpack.c.b16 %v665, %v661
        %v790 = vpack.c.b16 %v666, %v662
        %v791 = vpack.c.b16 %v671, %v667
        %v792 = vpack.c.b16 %v672, %v668
        %v793 = vpack.c.b16 %v673, %v669
        %v794 = vpack.c.b16 %v674, %v670
        %v795 = vpack.c.b16 %v679, %v675
        %v796 = vpack.c.b16 %v680, %v676
        %v797 = vpack.c.b16 %v681, %v677
        %v798 = vpack.c.b16 %v682, %v678
        %v799 = vpack.c.b16 %v687, %v683
        %v800 = vpack.c.b16 %v688, %v684
        %v801 = vpack.c.b16 %v689, %v685
        %v802 = vpack.c.b16 %v690, %v686
        %v803 = vpack.c.b16 %v695, %v691
        %v804 = vpack.c.b16 %v696, %v692
        %v805 = vpack.c.b16 %v697, %v693
        %v806 = vpack.c.b16 %v698, %v694
        %vm915 = vcmask 392192
        %v917 = vsel %vm915, %v371, 0
        %919 = vmatprep.subr.bf16.mxu0 %v700
        %920 = vmatpush1.bf16.msra.mxu0 %v699
        %921 = vmatprep.subr.bf16.mxu0 %v704
        %922 = vmatpush1.bf16.msra.mxu0 %v703
        %923 = vmatprep.subr.bf16.mxu0 %v708
        %924 = vmatpush1.bf16.msra.mxu0 %v707
        %925 = vmatprep.subr.bf16.mxu0 %v712
        %926 = vmatpush1.bf16.msra.mxu0 %v711
        %927 = vmatprep.subr.bf16.mxu0 %v716
        %928 = vmatpush1.bf16.msra.mxu0 %v715
        %929 = vmatprep.subr.bf16.mxu0 %v720
        %930 = vmatpush1.bf16.msra.mxu0 %v719
        %931 = vmatprep.subr.bf16.mxu0 %v724
        %932 = vmatpush1.bf16.msra.mxu0 %v723
        %933 = vmatprep.subr.bf16.mxu0 %v728
        %934 = vmatpush1.bf16.msra.mxu0 %v727
        %935 = vmatprep.subr.bf16.mxu0 %v732
        %936 = vmatpush1.bf16.msra.mxu0 %v731
        %937 = vmatprep.subr.bf16.mxu0 %v736
        %938 = vmatpush1.bf16.msra.mxu0 %v735
        %939 = vmatprep.subr.bf16.mxu0 %v740
        %940 = vmatpush1.bf16.msra.mxu0 %v739
        %941 = vmatprep.subr.bf16.mxu0 %v744
        %942 = vmatpush1.bf16.msra.mxu0 %v743
        %943 = vmatprep.subr.bf16.mxu0 %v748
        %944 = vmatpush1.bf16.msra.mxu0 %v747
        %945 = vmatprep.subr.bf16.mxu0 %v752
        %946 = vmatpush1.bf16.msra.mxu0 %v751
        %947 = vmatprep.subr.bf16.mxu0 %v756
        %948 = vmatpush1.bf16.msra.mxu0 %v755
        %949 = vmatprep.subr.bf16.mxu0 %v760
        %950 = vmatpush1.bf16.msra.mxu0 %v759
        %951 = vmatprep.mubr.bf16.mxu0 %v369
        %952 = vmatmul.mubr.bf16.gmra.mrb[0].mxu0 %v368
        %v953 = vpop.f32.mrb[0].mxu0
        %v954 = vadd.f32 0.0, %v953
        %v955 = vpop.f32.mrb[0].mxu0
        %v956 = vadd.f32 0.0, %v955
        %v957 = vpop.f32.mrb[0].mxu0
        %v958 = vadd.f32 0.0, %v957
        %v959 = vpop.f32.mrb[0].mxu0
        %v960 = vadd.f32 0.0, %v959
        %961 = vdwg.mxu0
        %962 = vmatprep.subr.bf16.mxu0 %v764
        %963 = vmatpush1.bf16.msra.mxu0 %v763
        %964 = vmatprep.subr.bf16.mxu0 %v768
        %965 = vmatpush1.bf16.msra.mxu0 %v767
        %966 = vmatprep.subr.bf16.mxu0 %v772
        %967 = vmatpush1.bf16.msra.mxu0 %v771
        %968 = vmatprep.subr.bf16.mxu0 %v776
        %969 = vmatpush1.bf16.msra.mxu0 %v775
        %970 = vmatprep.subr.bf16.mxu0 %v780
        %971 = vmatpush1.bf16.msra.mxu0 %v779
        %972 = vmatprep.subr.bf16.mxu0 %v784
        %973 = vmatpush1.bf16.msra.mxu0 %v783
        %974 = vmatprep.subr.bf16.mxu0 %v788
        %975 = vmatpush1.bf16.msra.mxu0 %v787
        %976 = vmatprep.subr.bf16.mxu0 %v792
        %977 = vmatpush1.bf16.msra.mxu0 %v791
        %978 = vmatprep.subr.bf16.mxu0 %v796
        %979 = vmatpush1.bf16.msra.mxu0 %v795
        %980 = vmatprep.subr.bf16.mxu0 %v800
        %981 = vmatpush1.bf16.msra.mxu0 %v799
        %982 = vmatprep.subr.bf16.mxu0 %v804
        %983 = vmatpush1.bf16.msra.mxu0 %v803
        %984 = vmatprep.subr.bf16.mxu0 0
        %985 = vmatpush1.bf16.msra.mxu0 0
        %986 = vmatprep.subr.bf16.mxu0 0
        %987 = vmatpush1.bf16.msra.mxu0 0
        %988 = vmatprep.subr.bf16.mxu0 0
        %989 = vmatpush1.bf16.msra.mxu0 0
        %990 = vmatprep.subr.bf16.mxu0 0
        %991 = vmatpush1.bf16.msra.mxu0 0
        %992 = vmatprep.subr.bf16.mxu0 0
        %993 = vmatpush1.bf16.msra.mxu0 0
        %994 = vmatprep.mubr.bf16.mxu0 %v917
        %995 = vmatmul.mubr.bf16.gmra.mrb[0].mxu0 %v370
        %v996 = vpop.f32.mrb[0].mxu0
        %v997 = vadd.f32 %v954, %v996
        %v998 = vpop.f32.mrb[0].mxu0
        %v999 = vadd.f32 %v956, %v998
        %v1000 = vpop.f32.mrb[0].mxu0
        %v1001 = vadd.f32 %v958, %v1000
        %v1002 = vpop.f32.mrb[0].mxu0
        %v1003 = vadd.f32 %v960, %v1002
        %1004 = vdwg.mxu0
        %1005 = vmatprep.subr.bf16.mxu0 %v702
        %1006 = vmatpush1.bf16.msra.mxu0 %v701
        %1007 = vmatprep.subr.bf16.mxu0 %v706
        %1008 = vmatpush1.bf16.msra.mxu0 %v705
        %1009 = vmatprep.subr.bf16.mxu0 %v710
        %1010 = vmatpush1.bf16.msra.mxu0 %v709
        %1011 = vmatprep.subr.bf16.mxu0 %v714
        %1012 = vmatpush1.bf16.msra.mxu0 %v713
        %1013 = vmatprep.subr.bf16.mxu0 %v718
        %1014 = vmatpush1.bf16.msra.mxu0 %v717
        %1015 = vmatprep.subr.bf16.mxu0 %v722
        %1016 = vmatpush1.bf16.msra.mxu0 %v721
        %1017 = vmatprep.subr.bf16.mxu0 %v726
        %1018 = vmatpush1.bf16.msra.mxu0 %v725
        %1019 = vmatprep.subr.bf16.mxu0 %v730
        %1020 = vmatpush1.bf16.msra.mxu0 %v729
        %1021 = vmatprep.subr.bf16.mxu0 %v734
        %1022 = vmatpush1.bf16.msra.mxu0 %v733
        %1023 = vmatprep.subr.bf16.mxu0 %v738
        %1024 = vmatpush1.bf16.msra.mxu0 %v737
        %1025 = vmatprep.subr.bf16.mxu0 %v742
        %1026 = vmatpush1.bf16.msra.mxu0 %v741
        %1027 = vmatprep.subr.bf16.mxu0 %v746
        %1028 = vmatpush1.bf16.msra.mxu0 %v745
        %1029 = vmatprep.subr.bf16.mxu0 %v750
        %1030 = vmatpush1.bf16.msra.mxu0 %v749
        %1031 = vmatprep.subr.bf16.mxu0 %v754
        %1032 = vmatpush1.bf16.msra.mxu0 %v753
        %1033 = vmatprep.subr.bf16.mxu0 %v758
        %1034 = vmatpush1.bf16.msra.mxu0 %v757
        %1035 = vmatprep.subr.bf16.mxu0 %v762
        %1036 = vmatpush1.bf16.msra.mxu0 %v761
        %1037 = vmatprep.mubr.bf16.mxu0 %v369
        %1038 = vmatmul.mubr.bf16.gmra.mrb[0].mxu0 %v368
        %v1039 = vpop.f32.mrb[0].mxu0
        %v1040 = vadd.f32 0.0, %v1039
        %v1041 = vpop.f32.mrb[0].mxu0
        %v1042 = vadd.f32 0.0, %v1041
        %v1043 = vpop.f32.mrb[0].mxu0
        %v1044 = vadd.f32 0.0, %v1043
        %v1045 = vpop.f32.mrb[0].mxu0
        %v1046 = vadd.f32 0.0, %v1045
        %1047 = vdwg.mxu0
        %1048 = vmatprep.subr.bf16.mxu0 %v766
        %1049 = vmatpush1.bf16.msra.mxu0 %v765
        %1050 = vmatprep.subr.bf16.mxu0 %v770
        %1051 = vmatpush1.bf16.msra.mxu0 %v769
        %1052 = vmatprep.subr.bf16.mxu0 %v774
        %1053 = vmatpush1.bf16.msra.mxu0 %v773
        %1054 = vmatprep.subr.bf16.mxu0 %v778
        %1055 = vmatpush1.bf16.msra.mxu0 %v777
        %1056 = vmatprep.subr.bf16.mxu0 %v782
        %1057 = vmatpush1.bf16.msra.mxu0 %v781
        %1058 = vmatprep.subr.bf16.mxu0 %v786
        %1059 = vmatpush1.bf16.msra.mxu0 %v785
        %1060 = vmatprep.subr.bf16.mxu0 %v790
        %1061 = vmatpush1.bf16.msra.mxu0 %v789
        %1062 = vmatprep.subr.bf16.mxu0 %v794
        %1063 = vmatpush1.bf16.msra.mxu0 %v793
        %1064 = vmatprep.subr.bf16.mxu0 %v798
        %1065 = vmatpush1.bf16.msra.mxu0 %v797
        %1066 = vmatprep.subr.bf16.mxu0 %v802
        %1067 = vmatpush1.bf16.msra.mxu0 %v801
        %1068 = vmatprep.subr.bf16.mxu0 %v806
        %1069 = vmatpush1.bf16.msra.mxu0 %v805
        %1070 = vmatprep.subr.bf16.mxu0 0
        %1071 = vmatpush1.bf16.msra.mxu0 0
        %1072 = vmatprep.subr.bf16.mxu0 0
        %1073 = vmatpush1.bf16.msra.mxu0 0
        %1074 = vmatprep.subr.bf16.mxu0 0
        %1075 = vmatpush1.bf16.msra.mxu0 0
        %1076 = vmatprep.subr.bf16.mxu0 0
        %1077 = vmatpush1.bf16.msra.mxu0 0
        %1078 = vmatprep.subr.bf16.mxu0 0
        %1079 = vmatpush1.bf16.msra.mxu0 0
        %1080 = vmatprep.mubr.bf16.mxu0 %v917
        %1081 = vmatmul.mubr.bf16.gmra.mrb[0].mxu0 %v370
        %v1082 = vpop.f32.mrb[0].mxu0
        %v1083 = vadd.f32 %v1040, %v1082
        %v1084 = vpop.f32.mrb[0].mxu0
        %v1085 = vadd.f32 %v1042, %v1084
        %v1086 = vpop.f32.mrb[0].mxu0
        %v1087 = vadd.f32 %v1044, %v1086
        %v1088 = vpop.f32.mrb[0].mxu0
        %v1089 = vadd.f32 %v1046, %v1088
        %1090 = vdwg.mxu0
        %v1091 = vmax.f32 %v997, 0.0
        %v1092 = vmax.f32 %v999, 0.0
        %v1093 = vmax.f32 %v1083, 0.0
        %v1094 = vmax.f32 %v1085, 0.0
        %v1095 = vmax.f32 %v1001, 0.0
        %v1096 = vmax.f32 %v1003, 0.0
        %v1097 = vmax.f32 %v1087, 0.0
        %v1098 = vmax.f32 %v1089, 0.0
        %v1099 = vld [vmem:[%s4] sm:$0xff]
        %v1100 = vld [vmem:[%s4 + $0x8] sm:$0xff]
        %vm1101 = vcmask 130048
        %v1103 = vsel %vm1101, %v1099, 0
        %v1106 = vsel %vm1101, %v1100, 0
        %1108 = vmatprep.subr.mxu0 %v1092
        %1109 = vmatpush1.msra.mxu0 %v1091
        %1110 = vmatprep.subr.mxu0 %v1096
        %1111 = vmatpush1.msra.mxu0 %v1095
        %1112 = vmatprep.subr.mxu0 0.0
        %1113 = vmatpush1.msra.mxu0 0.0
        %1114 = vmatprep.subr.mxu0 0.0
        %1115 = vmatpush1.msra.mxu0 0.0
        %1116 = vmatprep.subr.mxu0 0.0
        %1117 = vmatpush1.msra.mxu0 0.0
        %1118 = vmatprep.subr.mxu0 0.0
        %1119 = vmatpush1.msra.mxu0 0.0
        %1120 = vmatprep.subr.mxu0 0.0
        %1121 = vmatpush1.msra.mxu0 0.0
        %1122 = vmatprep.subr.mxu0 0.0
        %1123 = vmatpush1.msra.mxu0 0.0
        %1124 = vmatprep.subr.mxu0 0.0
        %1125 = vmatpush1.msra.mxu0 0.0
        %1126 = vmatprep.subr.mxu0 0.0
        %1127 = vmatpush1.msra.mxu0 0.0
        %1128 = vmatprep.subr.mxu0 0.0
        %1129 = vmatpush1.msra.mxu0 0.0
        %1130 = vmatprep.subr.mxu0 0.0
        %1131 = vmatpush1.msra.mxu0 0.0
        %1132 = vmatprep.subr.mxu0 0.0
        %1133 = vmatpush1.msra.mxu0 0.0
        %1134 = vmatprep.subr.mxu0 0.0
        %1135 = vmatpush1.msra.mxu0 0.0
        %1136 = vmatprep.subr.mxu0 0.0
        %1137 = vmatpush1.msra.mxu0 0.0
        %1138 = vmatprep.subr.mxu0 0.0
        %1139 = vmatpush1.msra.mxu0 0.0
        %1140 = vmatprep.subr.mxu0 0.0
        %1141 = vmatpush1.msra.mxu0 0.0
        %1142 = vmatprep.subr.mxu0 0.0
        %1143 = vmatpush1.msra.mxu0 0.0
        %1144 = vmatprep.subr.mxu0 0.0
        %1145 = vmatpush1.msra.mxu0 0.0
        %1146 = vmatprep.subr.mxu0 0.0
        %1147 = vmatpush1.msra.mxu0 0.0
        %1148 = vmatprep.subr.mxu0 0.0
        %1149 = vmatpush1.msra.mxu0 0.0
        %1150 = vmatprep.subr.mxu0 0.0
        %1151 = vmatpush1.msra.mxu0 0.0
        %1152 = vmatprep.subr.mxu0 0.0
        %1153 = vmatpush1.msra.mxu0 0.0
        %1154 = vmatprep.subr.mxu0 0.0
        %1155 = vmatpush1.msra.mxu0 0.0
        %1156 = vmatprep.subr.mxu0 0.0
        %1157 = vmatpush1.msra.mxu0 0.0
        %1158 = vmatprep.subr.mxu0 0.0
        %1159 = vmatpush1.msra.mxu0 0.0
        %1160 = vmatprep.subr.mxu0 0.0
        %1161 = vmatpush1.msra.mxu0 0.0
        %1162 = vmatprep.subr.mxu0 0.0
        %1163 = vmatpush1.msra.mxu0 0.0
        %1164 = vmatprep.subr.mxu0 0.0
        %1165 = vmatpush1.msra.mxu0 0.0
        %1166 = vmatprep.subr.mxu0 0.0
        %1167 = vmatpush1.msra.mxu0 0.0
        %1168 = vmatprep.subr.mxu0 0.0
        %1169 = vmatpush1.msra.mxu0 0.0
        %1170 = vmatprep.subr.mxu0 0.0
        %1171 = vmatpush1.msra.mxu0 0.0
        %1172 = vmatprep.mubr.f32.mxu0 0.0
        %1173 = vmatmul.mubr.f32.gmra.mrb[0].mxu0 %v1103
        %v1174 = vpop.f32.mrb[0].mxu0
        %v1175 = vadd.f32 0.0, %v1174
        %v1176 = vpop.f32.mrb[0].mxu0
        %v1177 = vadd.f32 0.0, %v1176
        %1178 = vmatprep.mubr.f32.mxu0 0.0
        %1179 = vmatmul.mubr.f32.gmra.mrb[0].mxu0 %v1106
        %v1180 = vpop.f32.mrb[0].mxu0
        %v1181 = vadd.f32 0.0, %v1180
        %v1182 = vpop.f32.mrb[0].mxu0
        %v1183 = vadd.f32 0.0, %v1182
        %1184 = vdwg.mxu0
        %1185 = vmatprep.subr.mxu0 %v1094
        %1186 = vmatpush1.msra.mxu0 %v1093
        %1187 = vmatprep.subr.mxu0 %v1098
        %1188 = vmatpush1.msra.mxu0 %v1097
        %1189 = vmatprep.subr.mxu0 0.0
        %1190 = vmatpush1.msra.mxu0 0.0
        %1191 = vmatprep.subr.mxu0 0.0
        %1192 = vmatpush1.msra.mxu0 0.0
        %1193 = vmatprep.subr.mxu0 0.0
        %1194 = vmatpush1.msra.mxu0 0.0
        %1195 = vmatprep.subr.mxu0 0.0
        %1196 = vmatpush1.msra.mxu0 0.0
        %1197 = vmatprep.subr.mxu0 0.0
        %1198 = vmatpush1.msra.mxu0 0.0
        %1199 = vmatprep.subr.mxu0 0.0
        %1200 = vmatpush1.msra.mxu0 0.0
        %1201 = vmatprep.subr.mxu0 0.0
        %1202 = vmatpush1.msra.mxu0 0.0
        %1203 = vmatprep.subr.mxu0 0.0
        %1204 = vmatpush1.msra.mxu0 0.0
        %1205 = vmatprep.subr.mxu0 0.0
        %1206 = vmatpush1.msra.mxu0 0.0
        %1207 = vmatprep.subr.mxu0 0.0
        %1208 = vmatpush1.msra.mxu0 0.0
        %1209 = vmatprep.subr.mxu0 0.0
        %1210 = vmatpush1.msra.mxu0 0.0
        %1211 = vmatprep.subr.mxu0 0.0
        %1212 = vmatpush1.msra.mxu0 0.0
        %1213 = vmatprep.subr.mxu0 0.0
        %1214 = vmatpush1.msra.mxu0 0.0
        %1215 = vmatprep.subr.mxu0 0.0
        %1216 = vmatpush1.msra.mxu0 0.0
        %1217 = vmatprep.subr.mxu0 0.0
        %1218 = vmatpush1.msra.mxu0 0.0
        %1219 = vmatprep.subr.mxu0 0.0
        %1220 = vmatpush1.msra.mxu0 0.0
        %1221 = vmatprep.subr.mxu0 0.0
        %1222 = vmatpush1.msra.mxu0 0.0
        %1223 = vmatprep.subr.mxu0 0.0
        %1224 = vmatpush1.msra.mxu0 0.0
        %1225 = vmatprep.subr.mxu0 0.0
        %1226 = vmatpush1.msra.mxu0 0.0
        %1227 = vmatprep.subr.mxu0 0.0
        %1228 = vmatpush1.msra.mxu0 0.0
        %1229 = vmatprep.subr.mxu0 0.0
        %1230 = vmatpush1.msra.mxu0 0.0
        %1231 = vmatprep.subr.mxu0 0.0
        %1232 = vmatpush1.msra.mxu0 0.0
        %1233 = vmatprep.subr.mxu0 0.0
        %1234 = vmatpush1.msra.mxu0 0.0
        %1235 = vmatprep.subr.mxu0 0.0
        %1236 = vmatpush1.msra.mxu0 0.0
        %1237 = vmatprep.subr.mxu0 0.0
        %1238 = vmatpush1.msra.mxu0 0.0
        %1239 = vmatprep.subr.mxu0 0.0
        %1240 = vmatpush1.msra.mxu0 0.0
        %1241 = vmatprep.subr.mxu0 0.0
        %1242 = vmatpush1.msra.mxu0 0.0
        %1243 = vmatprep.subr.mxu0 0.0
        %1244 = vmatpush1.msra.mxu0 0.0
        %1245 = vmatprep.subr.mxu0 0.0
        %1246 = vmatpush1.msra.mxu0 0.0
        %1247 = vmatprep.subr.mxu0 0.0
        %1248 = vmatpush1.msra.mxu0 0.0
        %1249 = vmatprep.mubr.f32.mxu0 0.0
        %1250 = vmatmul.mubr.f32.gmra.mrb[0].mxu0 %v1103
        %v1251 = vpop.f32.mrb[0].mxu0
        %v1252 = vadd.f32 0.0, %v1251
        %v1253 = vpop.f32.mrb[0].mxu0
        %v1254 = vadd.f32 0.0, %v1253
        %1255 = vmatprep.mubr.f32.mxu0 0.0
        %1256 = vmatmul.mubr.f32.gmra.mrb[0].mxu0 %v1106
        %v1257 = vpop.f32.mrb[0].mxu0
        %v1258 = vadd.f32 0.0, %v1257
        %v1259 = vpop.f32.mrb[0].mxu0
        %v1260 = vadd.f32 0.0, %v1259
        %1261 = vdwg.mxu0
        %v1262 = vmul.f32 %v1091, %v1091
        %v1263 = vmul.f32 %v1092, %v1092
        %v1264 = vmul.f32 %v1093, %v1093
        %v1265 = vmul.f32 %v1094, %v1094
        %v1266 = vmul.f32 %v1095, %v1095
        %v1267 = vmul.f32 %v1096, %v1096
        %v1268 = vmul.f32 %v1097, %v1097
        %v1269 = vmul.f32 %v1098, %v1098
        %1270 = vmatprep.subr.mxu0 %v1263
        %1271 = vmatpush1.msra.mxu0 %v1262
        %1272 = vmatprep.subr.mxu0 %v1267
        %1273 = vmatpush1.msra.mxu0 %v1266
        %1274 = vmatprep.subr.mxu0 0.0
        %1275 = vmatpush1.msra.mxu0 0.0
        %1276 = vmatprep.subr.mxu0 0.0
        %1277 = vmatpush1.msra.mxu0 0.0
        %1278 = vmatprep.subr.mxu0 0.0
        %1279 = vmatpush1.msra.mxu0 0.0
        %1280 = vmatprep.subr.mxu0 0.0
        %1281 = vmatpush1.msra.mxu0 0.0
        %1282 = vmatprep.subr.mxu0 0.0
        %1283 = vmatpush1.msra.mxu0 0.0
        %1284 = vmatprep.subr.mxu0 0.0
        %1285 = vmatpush1.msra.mxu0 0.0
        %1286 = vmatprep.subr.mxu0 0.0
        %1287 = vmatpush1.msra.mxu0 0.0
        %1288 = vmatprep.subr.mxu0 0.0
        %1289 = vmatpush1.msra.mxu0 0.0
        %1290 = vmatprep.subr.mxu0 0.0
        %1291 = vmatpush1.msra.mxu0 0.0
        %1292 = vmatprep.subr.mxu0 0.0
        %1293 = vmatpush1.msra.mxu0 0.0
        %1294 = vmatprep.subr.mxu0 0.0
        %1295 = vmatpush1.msra.mxu0 0.0
        %1296 = vmatprep.subr.mxu0 0.0
        %1297 = vmatpush1.msra.mxu0 0.0
        %1298 = vmatprep.subr.mxu0 0.0
        %1299 = vmatpush1.msra.mxu0 0.0
        %1300 = vmatprep.subr.mxu0 0.0
        %1301 = vmatpush1.msra.mxu0 0.0
        %1302 = vmatprep.subr.mxu0 0.0
        %1303 = vmatpush1.msra.mxu0 0.0
        %1304 = vmatprep.subr.mxu0 0.0
        %1305 = vmatpush1.msra.mxu0 0.0
        %1306 = vmatprep.subr.mxu0 0.0
        %1307 = vmatpush1.msra.mxu0 0.0
        %1308 = vmatprep.subr.mxu0 0.0
        %1309 = vmatpush1.msra.mxu0 0.0
        %1310 = vmatprep.subr.mxu0 0.0
        %1311 = vmatpush1.msra.mxu0 0.0
        %1312 = vmatprep.subr.mxu0 0.0
        %1313 = vmatpush1.msra.mxu0 0.0
        %1314 = vmatprep.subr.mxu0 0.0
        %1315 = vmatpush1.msra.mxu0 0.0
        %1316 = vmatprep.subr.mxu0 0.0
        %1317 = vmatpush1.msra.mxu0 0.0
        %1318 = vmatprep.subr.mxu0 0.0
        %1319 = vmatpush1.msra.mxu0 0.0
        %1320 = vmatprep.subr.mxu0 0.0
        %1321 = vmatpush1.msra.mxu0 0.0
        %1322 = vmatprep.subr.mxu0 0.0
        %1323 = vmatpush1.msra.mxu0 0.0
        %1324 = vmatprep.subr.mxu0 0.0
        %1325 = vmatpush1.msra.mxu0 0.0
        %1326 = vmatprep.subr.mxu0 0.0
        %1327 = vmatpush1.msra.mxu0 0.0
        %1328 = vmatprep.subr.mxu0 0.0
        %1329 = vmatpush1.msra.mxu0 0.0
        %1330 = vmatprep.subr.mxu0 0.0
        %1331 = vmatpush1.msra.mxu0 0.0
        %1332 = vmatprep.subr.mxu0 0.0
        %1333 = vmatpush1.msra.mxu0 0.0
        %1334 = vmatprep.mubr.f32.mxu0 0.0
        %1335 = vmatmul.mubr.f32.gmra.mrb[0].mxu0 %v1103
        %v1336 = vpop.f32.mrb[0].mxu0
        %v1337 = vadd.f32 0.0, %v1336
        %v1338 = vpop.f32.mrb[0].mxu0
        %v1339 = vadd.f32 0.0, %v1338
        %1340 = vmatprep.mubr.f32.mxu0 0.0
        %1341 = vmatmul.mubr.f32.gmra.mrb[0].mxu0 %v1106
        %v1342 = vpop.f32.mrb[0].mxu0
        %v1343 = vadd.f32 0.0, %v1342
        %v1344 = vpop.f32.mrb[0].mxu0
        %v1345 = vadd.f32 0.0, %v1344
        %1346 = vdwg.mxu0
        %1347 = vmatprep.subr.mxu0 %v1265
        %1348 = vmatpush1.msra.mxu0 %v1264
        %1349 = vmatprep.subr.mxu0 %v1269
        %1350 = vmatpush1.msra.mxu0 %v1268
        %1351 = vmatprep.subr.mxu0 0.0
        %1352 = vmatpush1.msra.mxu0 0.0
        %1353 = vmatprep.subr.mxu0 0.0
        %1354 = vmatpush1.msra.mxu0 0.0
        %1355 = vmatprep.subr.mxu0 0.0
        %1356 = vmatpush1.msra.mxu0 0.0
        %1357 = vmatprep.subr.mxu0 0.0
        %1358 = vmatpush1.msra.mxu0 0.0
        %1359 = vmatprep.subr.mxu0 0.0
        %1360 = vmatpush1.msra.mxu0 0.0
        %1361 = vmatprep.subr.mxu0 0.0
        %1362 = vmatpush1.msra.mxu0 0.0
        %1363 = vmatprep.subr.mxu0 0.0
        %1364 = vmatpush1.msra.mxu0 0.0
        %1365 = vmatprep.subr.mxu0 0.0
        %1366 = vmatpush1.msra.mxu0 0.0
        %1367 = vmatprep.subr.mxu0 0.0
        %1368 = vmatpush1.msra.mxu0 0.0
        %1369 = vmatprep.subr.mxu0 0.0
        %1370 = vmatpush1.msra.mxu0 0.0
        %1371 = vmatprep.subr.mxu0 0.0
        %1372 = vmatpush1.msra.mxu0 0.0
        %1373 = vmatprep.subr.mxu0 0.0
        %1374 = vmatpush1.msra.mxu0 0.0
        %1375 = vmatprep.subr.mxu0 0.0
        %1376 = vmatpush1.msra.mxu0 0.0
        %1377 = vmatprep.subr.mxu0 0.0
        %1378 = vmatpush1.msra.mxu0 0.0
        %1379 = vmatprep.subr.mxu0 0.0
        %1380 = vmatpush1.msra.mxu0 0.0
        %1381 = vmatprep.subr.mxu0 0.0
        %1382 = vmatpush1.msra.mxu0 0.0
        %1383 = vmatprep.subr.mxu0 0.0
        %1384 = vmatpush1.msra.mxu0 0.0
        %1385 = vmatprep.subr.mxu0 0.0
        %1386 = vmatpush1.msra.mxu0 0.0
        %1387 = vmatprep.subr.mxu0 0.0
        %1388 = vmatpush1.msra.mxu0 0.0
        %1389 = vmatprep.subr.mxu0 0.0
        %1390 = vmatpush1.msra.mxu0 0.0
        %1391 = vmatprep.subr.mxu0 0.0
        %1392 = vmatpush1.msra.mxu0 0.0
        %1393 = vmatprep.subr.mxu0 0.0
        %1394 = vmatpush1.msra.mxu0 0.0
        %1395 = vmatprep.subr.mxu0 0.0
        %1396 = vmatpush1.msra.mxu0 0.0
        %1397 = vmatprep.subr.mxu0 0.0
        %1398 = vmatpush1.msra.mxu0 0.0
        %1399 = vmatprep.subr.mxu0 0.0
        %1400 = vmatpush1.msra.mxu0 0.0
        %1401 = vmatprep.subr.mxu0 0.0
        %1402 = vmatpush1.msra.mxu0 0.0
        %1403 = vmatprep.subr.mxu0 0.0
        %1404 = vmatpush1.msra.mxu0 0.0
        %1405 = vmatprep.subr.mxu0 0.0
        %1406 = vmatpush1.msra.mxu0 0.0
        %1407 = vmatprep.subr.mxu0 0.0
        %1408 = vmatpush1.msra.mxu0 0.0
        %1409 = vmatprep.subr.mxu0 0.0
        %1410 = vmatpush1.msra.mxu0 0.0
        %1411 = vmatprep.mubr.f32.mxu0 0.0
        %1412 = vmatmul.mubr.f32.gmra.mrb[0].mxu0 %v1103
        %v1413 = vpop.f32.mrb[0].mxu0
        %v1414 = vadd.f32 0.0, %v1413
        %v1415 = vpop.f32.mrb[0].mxu0
        %v1416 = vadd.f32 0.0, %v1415
        %1417 = vmatprep.mubr.f32.mxu0 0.0
        %1418 = vmatmul.mubr.f32.gmra.mrb[0].mxu0 %v1106
        %v1419 = vpop.f32.mrb[0].mxu0
        %v1420 = vadd.f32 0.0, %v1419
        %v1421 = vpop.f32.mrb[0].mxu0
        %v1422 = vadd.f32 0.0, %v1421
        %1423 = vdwg.mxu0
        %v1424 = vadd.f32 %v1175, %v1177
        %v1425 = vadd.f32 %v1424, %v1252
        %v1426 = vadd.f32 %v1425, %v1254
        %1427 = vadd.xlane.f32.xlu0 %v1426
        %v1428 = vpop.xlane.xlu0 %1427
        %v1429 = vadd.f32 %v1181, %v1183
        %v1430 = vadd.f32 %v1429, %v1258
        %v1431 = vadd.f32 %v1430, %v1260
        %1432 = vadd.xlane.f32.xlu0 %v1431
        %v1433 = vpop.xlane.xlu0 %1432
        %v1434 = vmul.f32 %v1428, 0.0009765625
        %v1435 = vmul.f32 %v1433, 0.0009765625
        %v1436 = vadd.f32 %v1337, %v1339
        %v1437 = vadd.f32 %v1436, %v1414
        %v1438 = vadd.f32 %v1437, %v1416
        %1439 = vadd.xlane.f32.xlu0 %v1438
        %v1440 = vpop.xlane.xlu0 %1439
        %v1441 = vadd.f32 %v1343, %v1345
        %v1442 = vadd.f32 %v1441, %v1420
        %v1443 = vadd.f32 %v1442, %v1422
        %1444 = vadd.xlane.f32.xlu0 %v1443
        %v1445 = vpop.xlane.xlu0 %1444
        %v1446 = vmul.f32 %v1440, 0.0009765625
        %v1447 = vmul.f32 %v1445, 0.0009765625
        %v1448 = vmul.f32 %v1434, %v1434
        %v1449 = vmul.f32 %v1435, %v1435
        %v1450 = vsub.f32 %v1446, %v1448
        %v1451 = vsub.f32 %v1447, %v1449
        %v1452 = vmax.f32 %v1450, 0.0
        %v1453 = vmax.f32 %v1451, 0.0
        %v1454 = vadd.f32 %v1452, 1e-05
        %v1455 = vadd.f32 %v1453, 1e-05
        %v1456 = vrsqrt.pop %v1454
        %v1457 = vrsqrt.pop %v1455
        %v1458 = vsub.f32 %v1091, %v1434
        %v1459 = vsub.f32 %v1092, %v1434
        %v1460 = vsub.f32 %v1093, %v1434
        %v1461 = vsub.f32 %v1094, %v1434
        %v1462 = vsub.f32 %v1095, %v1435
        %v1463 = vsub.f32 %v1096, %v1435
        %v1464 = vsub.f32 %v1097, %v1435
        %v1465 = vsub.f32 %v1098, %v1435
        %v1466 = vmul.f32 %v1458, %v1456
        %v1467 = vmul.f32 %v1459, %v1456
        %v1468 = vmul.f32 %v1460, %v1456
        %v1469 = vmul.f32 %v1461, %v1456
        %v1470 = vmul.f32 %v1462, %v1457
        %v1471 = vmul.f32 %v1463, %v1457
        %v1472 = vmul.f32 %v1464, %v1457
        %v1473 = vmul.f32 %v1465, %v1457
        %v1474 = vld [vmem:[%s2] sm:$0xff]
        %v1475 = vld [vmem:[%s2 + $0x8] sm:$0xff]
        %1477 = vset.pattern.permute.xlu0 0
        %1478 = vperm.xlu0 %1477, %v1474
        %v1479 = vpop.permute.xlu0 %1478
        %1482 = vset.pattern.permute.xlu0 0
        %1483 = vperm.xlu0 %1482, %v1475
        %v1484 = vpop.permute.xlu0 %1483
        %v1486 = vmul.f32 %v1466, %v1479
        %v1487 = vmul.f32 %v1467, %v1479
        %v1488 = vmul.f32 %v1468, %v1479
        %v1489 = vmul.f32 %v1469, %v1479
        %v1490 = vmul.f32 %v1470, %v1484
        %v1491 = vmul.f32 %v1471, %v1484
        %v1492 = vmul.f32 %v1472, %v1484
        %v1493 = vmul.f32 %v1473, %v1484
        %v1494 = vld [vmem:[%s3] sm:$0xff]
        %v1495 = vld [vmem:[%s3 + $0x8] sm:$0xff]
        %1497 = vset.pattern.permute.xlu0 0
        %1498 = vperm.xlu0 %1497, %v1494
        %v1499 = vpop.permute.xlu0 %1498
        %1502 = vset.pattern.permute.xlu0 0
        %1503 = vperm.xlu0 %1502, %v1495
        %v1504 = vpop.permute.xlu0 %1503
        %v1506 = vadd.f32 %v1486, %v1499
        %v1507 = vadd.f32 %v1487, %v1499
        %v1508 = vadd.f32 %v1488, %v1499
        %v1509 = vadd.f32 %v1489, %v1499
        %v1510 = vadd.f32 %v1490, %v1504
        %v1511 = vadd.f32 %v1491, %v1504
        %v1512 = vadd.f32 %v1492, %v1504
        %v1513 = vadd.f32 %v1493, %v1504
        %1514 = vst [vmem:[%s242] sm:$0xff] %v1506
        %1515 = vst [vmem:[%s242 + $0x8] sm:$0xff] %v1507
        %1516 = vst [vmem:[%s242 + $0x10] sm:$0xff] %v1508
        %1517 = vst [vmem:[%s242 + $0x18] sm:$0xff] %v1509
        %1518 = vst [vmem:[%s242 + $0x20] sm:$0xff] %v1510
        %1519 = vst [vmem:[%s242 + $0x28] sm:$0xff] %v1511
        %1520 = vst [vmem:[%s242 + $0x30] sm:$0xff] %v1512
        %1521 = vst [vmem:[%s242 + $0x38] sm:$0xff] %v1513
        %s1522 = sand.u32 %s140, 1
        %s1523 = scalar_lea.sflag [#allocation4], %s1522
        %s1524 = sand.u32 %s140, 1
        %s1525 = smul.addr %s1524, 64
        %s1526 = scalar_lea.vmem [#allocation5], %s1525
        // Predicated region
        $region45: #{tpu_custom_call.1} parent=39 // pred_check
          %p1527 = pneg %p150
        $region46: #{tpu_custom_call.1} parent=39 // pred_check_branch
          %1529 = sbr.rel (%p1527) target = $region48
        $region47: #{tpu_custom_call.1} parent=39 // pred_region
          %s1531 = ssub.s32 1024, 1024
          %1532 = vsyncadd %s1523, %s1531
          %s1533 = smul.addr %s22, 8
          %s1534 = smul.addr %s1533, 128
          %s1535 = scalar_lea.hbm %s5, %s1534
          %s1536 = sshll.u32 %s1526, 4
          %s1537 = int_to_ptr.vmem [resolvable:$true] %s1536
          %1542 = dma.vmem_to_hbm [thread:$0]  %s1537, 1024, %s1535, %s1523, 512, 512, 32
        $region48: #{tpu_custom_call.1} parent=39 // pred_fallthru
          _
      $region40: #{tpu_custom_call.1} parent=5 // pred_fallthru
        _
      %p1543 = scmp.le.s32.totalorder 2, %s17
      // Predicated region
      $region49: #{tpu_custom_call.1} parent=5 // pred_check
        %p1544 = pneg %p1543
      $region50: #{tpu_custom_call.1} parent=5 // pred_check_branch
        %1546 = sbr.rel (%p1544) target = $region52
      $region51: #{tpu_custom_call.1} parent=5 // pred_region
        %s1547 = ssub.s32 %s17, 2
        // Predicated region
        $region53: #{tpu_custom_call.1} parent=51 // pred_check
          %p1548 = pneg %p156
        $region54: #{tpu_custom_call.1} parent=51 // pred_check_branch
          %1550 = sbr.rel (%p1548) target = $region56
        $region55: #{tpu_custom_call.1} parent=51 // pred_region
          %s1551 = sand.u32 %s141, 1
          %s1552 = scalar_lea.sflag [#allocation4], %s1551
          %s1553 = sand.u32 %s141, 1
          %s1554 = smul.addr %s1553, 64
          %s1555 = scalar_lea.vmem [#allocation5], %s1554
          %1556 = dma.done %s1552, 1024
        $region56: #{tpu_custom_call.1} parent=51 // pred_fallthru
          _
      $region52: #{tpu_custom_call.1} parent=5 // pred_fallthru
        _
    $region6: #{tpu_custom_call.1} parent=1 // loop_footer
      %s21 = sadd.s32 1, %s17
    $region7: #{tpu_custom_call.1} parent=1 // loop_footer_branch
      %16 = sbr.rel target = $region3
    $region8: #{tpu_custom_call.1} parent=1 // loop_exit
      _
    %1557 = vsyncpa [#allocation3], 1
    %s1558 = scalar_lea.sflag [#allocation3], 1
    %1559 = vsyncpa %s1558, 1
    %1560 = vsyncpa [#allocation4], 1
    %s1561 = scalar_lea.sflag [#allocation4], 1
    %1562 = vsyncpa %s1561, 1

</llo_original>
